<compile_context>
chip_gen: v7x
topology: tpu7x:2x2x1
jax: 0.10.0
libtpu: 0.0.40
codegen_flags: <defaults>
</compile_context>

<pallas_src>
import functools

import jax
import jax.numpy as jnp
from jax.experimental import pallas as pl
from jax.experimental.pallas import tpu as pltpu

BN_EPS = 1e-5


# -----------------------------------------------------------------------------
# Fused Pallas kernel: all ConvBN layers + residual, activations stay in vregs.
# -----------------------------------------------------------------------------
def uencoder_kernel(x_ref, w_ref, aff_ref, o_ref):
    # x_ref  : (B, Cin, L)     PyTorch NCL input, f32 (no channel padding)
    # w_ref  : (NL, K, C, C)   per-layer conv taps, [layer, k, cout, cin],
    #                          zero-padded to C = cmax channels
    # aff_ref: (NL, 2, C, 1)   per-layer [gamma; beta], zero-padded
    # o_ref  : (B, FILT, L)    output = final ConvBN + conv_bn0 residual (NCL)
    B, _, L = x_ref.shape
    NL, K, C, _ = w_ref.shape
    FILT = o_ref.shape[1]
    pad = (K - 1) // 2

    def shift_l(h, d):
        # xs[..., l] = h[..., l + d], zero outside [0, L)  (Conv1d zero pad).
        if d == 0:
            return h
        z = jnp.zeros(h.shape[:-1] + (abs(d),), h.dtype)
        if d > 0:
            return jnp.concatenate([h[..., d:], z], axis=-1)
        return jnp.concatenate([z, h[..., : h.shape[-1] + d]], axis=-1)

    def conv_bn(h, layer):
        ci = h.shape[1]
        y = None
        for k in range(K):                        # static unroll over taps
            xs = shift_l(h, k - pad)              # (B, ci, L)
            wk = w_ref[layer, k]                  # (C, C)
            if ci != C:
                wk = wk[:, :ci]                   # real input channels only
            wb = jnp.broadcast_to(wk[None, :, :], (B, C, ci))
            yk = jax.lax.dot_general(             # (B, C, L) on the MXU
                wb, xs, (((2,), (1,)), ((0,), (0,))),
                preferred_element_type=jnp.float32)
            y = yk if y is None else y + yk
        # NOTE: Conv1d bias intentionally skipped: training-mode BN subtracts
        # the per-channel mean, which cancels the bias exactly.
        # BatchNorm1d (training stats over (B, L), biased var, two-pass).
        mean = jnp.mean(y, axis=(0, 2), keepdims=True)           # (1, C, 1)
        cen = y - mean
        var = jnp.mean(cen * cen, axis=(0, 2), keepdims=True)    # (1, C, 1)
        aff = aff_ref[layer]                                      # (2, C, 1)
        scale = aff[0:1] * jax.lax.rsqrt(var + BN_EPS)
        return jnp.maximum(cen * scale + aff[1:2], 0.0)           # ReLU

    h0 = conv_bn(x_ref[...], 0)              # conv_bn0 output, kept on-chip
    h = h0
    for i in range(1, NL):                   # from_encoder layers + final conv
        h = conv_bn(h, i)
    res = h + h0                             # residual add
    o_ref[...] = res if FILT == C else res[:, :FILT, :]


# -----------------------------------------------------------------------------
# Wrapper: NCL in, NCL out, no transposes / pads around the kernel.
# -----------------------------------------------------------------------------
@functools.partial(jax.jit, static_argnames=("filt", "pad"))
def uencoder_forward(w_stack, aff_stack, x_ncl, *, filt, pad):
    """x_ncl: (B, Cin, L) as in PyTorch Conv1d.  Returns (B, filt, L)."""
    B, cin, L = x_ncl.shape
    NL, K, cmax, _ = w_stack.shape
    assert K == 2 * pad + 1, "only 'same' conv (stride 1, L_out == L) supported"
    assert cin <= cmax and filt <= cmax

    vmem = pl.BlockSpec(memory_space=pltpu.MemorySpace.VMEM)
    return pl.pallas_call(
        uencoder_kernel,
        out_shape=jax.ShapeDtypeStruct((B, filt, L), jnp.float32),
        in_specs=[vmem, vmem, vmem],
        out_specs=vmem,
        compiler_params=pltpu.CompilerParams(
            vmem_limit_bytes=32 * 1024 * 1024),
    )(x_ncl, w_stack, aff_stack)


# -----------------------------------------------------------------------------
# Parameters (PyTorch-like per layer: W(K,Cin,Cout), bias, gamma, beta)
# -----------------------------------------------------------------------------
def init_uencoder_params(key, in_channels, filt, middle, kernel_size, depth):
    # The residual add (out = final + conv_bn0) requires matching channels.
    assert filt == middle, "UEncoder residual add needs filter == middle_layer_filter"
    layer_io = ([(in_channels, filt)]
                + [(filt, middle)] * (depth - 1)      # from_encoder layers
                + [(middle, middle)])                 # final conv_bn
    params = []
    for i, (ci, co) in enumerate(layer_io):
        kw, kb, kg, kbe = jax.random.split(jax.random.fold_in(key, i), 4)
        w = 0.3 * jax.random.normal(kw, (kernel_size, ci, co), jnp.float32)
        b = 0.1 * jax.random.normal(kb, (co,), jnp.float32)
        g = 1.0 + 0.1 * jax.random.normal(kg, (co,), jnp.float32)
        be = 0.1 * jax.random.normal(kbe, (co,), jnp.float32)
        params.append((w, b, g, be))
    return params


def pack_params(params):
    """Stack per-layer params into the two fused-kernel operands.

    Weight layout for the kernel is channel-first: (NL, K, Cout, Cin),
    zero-padded to cmax (padded channels stay exactly zero through
    conv + BN + ReLU since gamma/beta are also zero-padded).  The conv bias is
    dropped: training-mode BN cancels it exactly.
    """
    K = params[0][0].shape[0]
    cmax = max(max(w.shape[1], w.shape[2]) for (w, _, _, _) in params)
    w_all, aff_all = [], []
    for (w, _b, g, be) in params:
        _, ci, co = w.shape
        wp = jnp.zeros((K, cmax, cmax), jnp.float32).at[:, :co, :ci].set(
            jnp.transpose(w, (0, 2, 1)))                    # [k, cout, cin]
        gp = jnp.zeros((cmax,), jnp.float32).at[:co].set(g)
        bp = jnp.zeros((cmax,), jnp.float32).at[:co].set(be)
        w_all.append(wp)
        aff_all.append(jnp.stack([gp, bp])[:, :, None])     # (2, cmax, 1)
    return jnp.stack(w_all), jnp.stack(aff_all)   # (NL,K,C,C), (NL,2,C,1)


# -----------------------------------------------------------------------------
# Pure-JAX reference mirroring the PyTorch module (bias kept, two-pass var).
# -----------------------------------------------------------------------------
def _convbn_ref(x_blc, w, b, g, be, pad):
    B, L, _ = x_blc.shape
    K = w.shape[0]
    xp = jnp.pad(x_blc, ((0, 0), (pad, pad), (0, 0)))
    acc = sum(jnp.einsum("blc,co->blo", xp[:, k:k + L, :], w[k],
                         precision=jax.lax.Precision.HIGHEST)
              for k in range(K))
    acc = acc + b[None, None, :]
    mean = acc.mean((0, 1), keepdims=True)
    var = ((acc - mean) ** 2).mean((0, 1), keepdims=True)
    y = (acc - mean) / jnp.sqrt(var + BN_EPS) * g[None, None, :] + be[None, None, :]
    return jnp.maximum(y, 0.0)


def _uencoder_ref(params, x_ncl, pad):
    x = jnp.transpose(x_ncl, (0, 2, 1))
    h0 = _convbn_ref(x, *params[0], pad)
    h = h0
    for p in params[1:-1]:
        h = _convbn_ref(h, *p, pad)
    h = _convbn_ref(h, *params[-1], pad)
    return jnp.transpose(h + h0, (0, 2, 1))


# -----------------------------------------------------------------------------
if __name__ == "__main__":
    # UEncoder(in_channels=4, filter=8, kernel_size=3, pooling_size=2,
    #          middle_layer_filter=8, depth=3, strides=1, padding=1)
    B, CIN, L = 2, 4, 16
    FILT, MID, KSZ, DEPTH, PAD = 8, 8, 3, 3, 1
    assert FILT == MID

    key = jax.random.PRNGKey(0)
    kx, kp = jax.random.split(key)
    x = jax.random.normal(kx, (B, CIN, L), jnp.float32)

    params = init_uencoder_params(kp, CIN, FILT, MID, KSZ, DEPTH)
    w_stack, aff_stack = pack_params(params)

    out = jax.block_until_ready(
        uencoder_forward(w_stack, aff_stack, x, filt=FILT, pad=PAD))
    assert out.shape == (B, FILT, L), out.shape
    assert out.dtype == jnp.float32

    ref = _uencoder_ref(params, x, PAD)
    if not bool(jnp.allclose(out, ref, rtol=1e-3, atol=1e-3)):
        raise AssertionError(
            "mismatch vs reference, max abs diff = "
            f"{float(jnp.max(jnp.abs(out - ref)))}")

    print("KERNEL_OK")
</pallas_src>

<mosaic_0001>
module attributes {stable_mosaic.version = 11 : i64} {
  func.func @uencoder_kernel(%arg0: memref<2x4x16xf32, #tpu.memory_space<vmem>>, %arg1: memref<4x3x8x8xf32, #tpu.memory_space<vmem>>, %arg2: memref<4x2x8x1xf32, #tpu.memory_space<vmem>>, %arg3: memref<2x8x16xf32, #tpu.memory_space<vmem>>) attributes {dimension_semantics = [], scalar_prefetch = 0 : i64, scratch_operands = 0 : i64, tpu.core_type = #tpu.core_type<tc>} {
    %c0 = arith.constant 0 : index
    %c0_0 = arith.constant 0 : index
    %c0_1 = arith.constant 0 : index
    %0 = vector.load %arg0[%c0, %c0_0, %c0_1] : memref<2x4x16xf32, #tpu.memory_space<vmem>>, vector<2x4x16xf32>
    %cst = arith.constant 0.000000e+00 : f32
    %1 = vector.broadcast %cst : f32 to vector<2x4x1xf32>
    %2 = vector.extract_strided_slice %0 {offsets = [0, 0, 0], sizes = [2, 4, 15], strides = [1, 1, 1]} : vector<2x4x16xf32> to vector<2x4x15xf32>
    %3 = tpu.concatenate %1, %2 in 2 : vector<2x4x1xf32>, vector<2x4x15xf32> -> vector<2x4x16xf32>
    %c0_2 = arith.constant 0 : index
    %c0_3 = arith.constant 0 : index
    %c0_4 = arith.constant 0 : index
    %c0_5 = arith.constant 0 : index
    %4 = vector.load %arg1[%c0_2, %c0_3, %c0_4, %c0_5] : memref<4x3x8x8xf32, #tpu.memory_space<vmem>>, vector<1x1x8x8xf32>
    %5 = vector.shape_cast %4 : vector<1x1x8x8xf32> to vector<8x8xf32>
    %6 = vector.extract_strided_slice %5 {offsets = [0, 0], sizes = [8, 4], strides = [1, 1]} : vector<8x8xf32> to vector<8x4xf32>
    %7 = vector.shape_cast %6 : vector<8x4xf32> to vector<1x8x4xf32>
    %8 = vector.shape_cast %7 : vector<1x8x4xf32> to vector<1x8x4xf32>
    %9 = vector.broadcast %8 : vector<1x8x4xf32> to vector<2x8x4xf32>
    %cst_6 = arith.constant dense<0.000000e+00> : vector<2x8x16xf32>
    %10 = tpu.matmul %9, %3, %cst_6 {dimension_numbers = #tpu.dot_dimension_numbers<[2], [1], [1], [2], [0, 0, 0, 1, 1, 2], [0], [0]>} : vector<2x8x4xf32>, vector<2x4x16xf32>, vector<2x8x16xf32> -> vector<2x8x16xf32>
    %c0_7 = arith.constant 0 : index
    %c1 = arith.constant 1 : index
    %c0_8 = arith.constant 0 : index
    %c0_9 = arith.constant 0 : index
    %11 = vector.load %arg1[%c0_7, %c1, %c0_8, %c0_9] : memref<4x3x8x8xf32, #tpu.memory_space<vmem>>, vector<1x1x8x8xf32>
    %12 = vector.shape_cast %11 : vector<1x1x8x8xf32> to vector<8x8xf32>
    %13 = vector.extract_strided_slice %12 {offsets = [0, 0], sizes = [8, 4], strides = [1, 1]} : vector<8x8xf32> to vector<8x4xf32>
    %14 = vector.shape_cast %13 : vector<8x4xf32> to vector<1x8x4xf32>
    %15 = vector.shape_cast %14 : vector<1x8x4xf32> to vector<1x8x4xf32>
    %16 = vector.broadcast %15 : vector<1x8x4xf32> to vector<2x8x4xf32>
    %cst_10 = arith.constant dense<0.000000e+00> : vector<2x8x16xf32>
    %17 = tpu.matmul %16, %0, %cst_10 {dimension_numbers = #tpu.dot_dimension_numbers<[2], [1], [1], [2], [0, 0, 0, 1, 1, 2], [0], [0]>} : vector<2x8x4xf32>, vector<2x4x16xf32>, vector<2x8x16xf32> -> vector<2x8x16xf32>
    %18 = arith.addf %10, %17 : vector<2x8x16xf32>
    %cst_11 = arith.constant 0.000000e+00 : f32
    %19 = vector.broadcast %cst_11 : f32 to vector<2x4x1xf32>
    %20 = vector.extract_strided_slice %0 {offsets = [0, 0, 1], sizes = [2, 4, 15], strides = [1, 1, 1]} : vector<2x4x16xf32> to vector<2x4x15xf32>
    %21 = tpu.concatenate %20, %19 in 2 : vector<2x4x15xf32>, vector<2x4x1xf32> -> vector<2x4x16xf32>
    %c0_12 = arith.constant 0 : index
    %c2 = arith.constant 2 : index
    %c0_13 = arith.constant 0 : index
    %c0_14 = arith.constant 0 : index
    %22 = vector.load %arg1[%c0_12, %c2, %c0_13, %c0_14] : memref<4x3x8x8xf32, #tpu.memory_space<vmem>>, vector<1x1x8x8xf32>
    %23 = vector.shape_cast %22 : vector<1x1x8x8xf32> to vector<8x8xf32>
    %24 = vector.extract_strided_slice %23 {offsets = [0, 0], sizes = [8, 4], strides = [1, 1]} : vector<8x8xf32> to vector<8x4xf32>
    %25 = vector.shape_cast %24 : vector<8x4xf32> to vector<1x8x4xf32>
    %26 = vector.shape_cast %25 : vector<1x8x4xf32> to vector<1x8x4xf32>
    %27 = vector.broadcast %26 : vector<1x8x4xf32> to vector<2x8x4xf32>
    %cst_15 = arith.constant dense<0.000000e+00> : vector<2x8x16xf32>
    %28 = tpu.matmul %27, %21, %cst_15 {dimension_numbers = #tpu.dot_dimension_numbers<[2], [1], [1], [2], [0, 0, 0, 1, 1, 2], [0], [0]>} : vector<2x8x4xf32>, vector<2x4x16xf32>, vector<2x8x16xf32> -> vector<2x8x16xf32>
    %29 = arith.addf %18, %28 : vector<2x8x16xf32>
    %cst_16 = arith.constant dense<0.000000e+00> : vector<8xf32>
    %30 = vector.multi_reduction <add>, %29, %cst_16 [0, 2] : vector<2x8x16xf32> to vector<8xf32>
    %31 = vector.shape_cast %30 : vector<8xf32> to vector<1x8x1xf32>
    %cst_17 = arith.constant 3.200000e+01 : f32
    %32 = vector.broadcast %cst_17 : f32 to vector<1x8x1xf32>
    %33 = arith.divf %31, %32 : vector<1x8x1xf32>
    %34 = vector.broadcast %33 : vector<1x8x1xf32> to vector<2x8x16xf32>
    %35 = arith.subf %29, %34 : vector<2x8x16xf32>
    %36 = arith.mulf %35, %35 : vector<2x8x16xf32>
    %cst_18 = arith.constant dense<0.000000e+00> : vector<8xf32>
    %37 = vector.multi_reduction <add>, %36, %cst_18 [0, 2] : vector<2x8x16xf32> to vector<8xf32>
    %38 = vector.shape_cast %37 : vector<8xf32> to vector<1x8x1xf32>
    %cst_19 = arith.constant 3.200000e+01 : f32
    %39 = vector.broadcast %cst_19 : f32 to vector<1x8x1xf32>
    %40 = arith.divf %38, %39 : vector<1x8x1xf32>
    %c0_20 = arith.constant 0 : index
    %c0_21 = arith.constant 0 : index
    %c0_22 = arith.constant 0 : index
    %c0_23 = arith.constant 0 : index
    %41 = vector.load %arg2[%c0_20, %c0_21, %c0_22, %c0_23] : memref<4x2x8x1xf32, #tpu.memory_space<vmem>>, vector<1x2x8x1xf32>
    %42 = vector.shape_cast %41 : vector<1x2x8x1xf32> to vector<2x8x1xf32>
    %43 = vector.extract_strided_slice %42 {offsets = [0, 0, 0], sizes = [1, 8, 1], strides = [1, 1, 1]} : vector<2x8x1xf32> to vector<1x8x1xf32>
    %cst_24 = arith.constant 9.99999974E-6 : f32
    %44 = vector.broadcast %cst_24 : f32 to vector<1x8x1xf32>
    %45 = arith.addf %40, %44 : vector<1x8x1xf32>
    %46 = math.rsqrt %45 : vector<1x8x1xf32>
    %47 = arith.mulf %43, %46 : vector<1x8x1xf32>
    %48 = vector.broadcast %47 : vector<1x8x1xf32> to vector<2x8x16xf32>
    %49 = arith.mulf %35, %48 : vector<2x8x16xf32>
    %50 = vector.extract_strided_slice %42 {offsets = [1, 0, 0], sizes = [1, 8, 1], strides = [1, 1, 1]} : vector<2x8x1xf32> to vector<1x8x1xf32>
    %51 = vector.broadcast %50 : vector<1x8x1xf32> to vector<2x8x16xf32>
    %52 = arith.addf %49, %51 : vector<2x8x16xf32>
    %cst_25 = arith.constant 0.000000e+00 : f32
    %53 = vector.broadcast %cst_25 : f32 to vector<2x8x16xf32>
    %54 = arith.maximumf %52, %53 : vector<2x8x16xf32>
    %cst_26 = arith.constant 0.000000e+00 : f32
    %55 = vector.broadcast %cst_26 : f32 to vector<2x8x1xf32>
    %56 = vector.extract_strided_slice %54 {offsets = [0, 0, 0], sizes = [2, 8, 15], strides = [1, 1, 1]} : vector<2x8x16xf32> to vector<2x8x15xf32>
    %57 = tpu.concatenate %55, %56 in 2 : vector<2x8x1xf32>, vector<2x8x15xf32> -> vector<2x8x16xf32>
    %c1_27 = arith.constant 1 : index
    %c0_28 = arith.constant 0 : index
    %c0_29 = arith.constant 0 : index
    %c0_30 = arith.constant 0 : index
    %58 = vector.load %arg1[%c1_27, %c0_28, %c0_29, %c0_30] : memref<4x3x8x8xf32, #tpu.memory_space<vmem>>, vector<1x1x8x8xf32>
    %59 = vector.shape_cast %58 : vector<1x1x8x8xf32> to vector<8x8xf32>
    %60 = vector.shape_cast %59 : vector<8x8xf32> to vector<1x8x8xf32>
    %61 = vector.shape_cast %60 : vector<1x8x8xf32> to vector<1x8x8xf32>
    %62 = vector.broadcast %61 : vector<1x8x8xf32> to vector<2x8x8xf32>
    %cst_31 = arith.constant dense<0.000000e+00> : vector<2x8x16xf32>
    %63 = tpu.matmul %62, %57, %cst_31 {dimension_numbers = #tpu.dot_dimension_numbers<[2], [1], [1], [2], [0, 0, 0, 1, 1, 2], [0], [0]>} : vector<2x8x8xf32>, vector<2x8x16xf32>, vector<2x8x16xf32> -> vector<2x8x16xf32>
    %c1_32 = arith.constant 1 : index
    %c1_33 = arith.constant 1 : index
    %c0_34 = arith.constant 0 : index
    %c0_35 = arith.constant 0 : index
    %64 = vector.load %arg1[%c1_32, %c1_33, %c0_34, %c0_35] : memref<4x3x8x8xf32, #tpu.memory_space<vmem>>, vector<1x1x8x8xf32>
    %65 = vector.shape_cast %64 : vector<1x1x8x8xf32> to vector<8x8xf32>
    %66 = vector.shape_cast %65 : vector<8x8xf32> to vector<1x8x8xf32>
    %67 = vector.shape_cast %66 : vector<1x8x8xf32> to vector<1x8x8xf32>
    %68 = vector.broadcast %67 : vector<1x8x8xf32> to vector<2x8x8xf32>
    %cst_36 = arith.constant dense<0.000000e+00> : vector<2x8x16xf32>
    %69 = tpu.matmul %68, %54, %cst_36 {dimension_numbers = #tpu.dot_dimension_numbers<[2], [1], [1], [2], [0, 0, 0, 1, 1, 2], [0], [0]>} : vector<2x8x8xf32>, vector<2x8x16xf32>, vector<2x8x16xf32> -> vector<2x8x16xf32>
    %70 = arith.addf %63, %69 : vector<2x8x16xf32>
    %cst_37 = arith.constant 0.000000e+00 : f32
    %71 = vector.broadcast %cst_37 : f32 to vector<2x8x1xf32>
    %72 = vector.extract_strided_slice %54 {offsets = [0, 0, 1], sizes = [2, 8, 15], strides = [1, 1, 1]} : vector<2x8x16xf32> to vector<2x8x15xf32>
    %73 = tpu.concatenate %72, %71 in 2 : vector<2x8x15xf32>, vector<2x8x1xf32> -> vector<2x8x16xf32>
    %c1_38 = arith.constant 1 : index
    %c2_39 = arith.constant 2 : index
    %c0_40 = arith.constant 0 : index
    %c0_41 = arith.constant 0 : index
    %74 = vector.load %arg1[%c1_38, %c2_39, %c0_40, %c0_41] : memref<4x3x8x8xf32, #tpu.memory_space<vmem>>, vector<1x1x8x8xf32>
    %75 = vector.shape_cast %74 : vector<1x1x8x8xf32> to vector<8x8xf32>
    %76 = vector.shape_cast %75 : vector<8x8xf32> to vector<1x8x8xf32>
    %77 = vector.shape_cast %76 : vector<1x8x8xf32> to vector<1x8x8xf32>
    %78 = vector.broadcast %77 : vector<1x8x8xf32> to vector<2x8x8xf32>
    %cst_42 = arith.constant dense<0.000000e+00> : vector<2x8x16xf32>
    %79 = tpu.matmul %78, %73, %cst_42 {dimension_numbers = #tpu.dot_dimension_numbers<[2], [1], [1], [2], [0, 0, 0, 1, 1, 2], [0], [0]>} : vector<2x8x8xf32>, vector<2x8x16xf32>, vector<2x8x16xf32> -> vector<2x8x16xf32>
    %80 = arith.addf %70, %79 : vector<2x8x16xf32>
    %cst_43 = arith.constant dense<0.000000e+00> : vector<8xf32>
    %81 = vector.multi_reduction <add>, %80, %cst_43 [0, 2] : vector<2x8x16xf32> to vector<8xf32>
    %82 = vector.shape_cast %81 : vector<8xf32> to vector<1x8x1xf32>
    %cst_44 = arith.constant 3.200000e+01 : f32
    %83 = vector.broadcast %cst_44 : f32 to vector<1x8x1xf32>
    %84 = arith.divf %82, %83 : vector<1x8x1xf32>
    %85 = vector.broadcast %84 : vector<1x8x1xf32> to vector<2x8x16xf32>
    %86 = arith.subf %80, %85 : vector<2x8x16xf32>
    %87 = arith.mulf %86, %86 : vector<2x8x16xf32>
    %cst_45 = arith.constant dense<0.000000e+00> : vector<8xf32>
    %88 = vector.multi_reduction <add>, %87, %cst_45 [0, 2] : vector<2x8x16xf32> to vector<8xf32>
    %89 = vector.shape_cast %88 : vector<8xf32> to vector<1x8x1xf32>
    %cst_46 = arith.constant 3.200000e+01 : f32
    %90 = vector.broadcast %cst_46 : f32 to vector<1x8x1xf32>
    %91 = arith.divf %89, %90 : vector<1x8x1xf32>
    %c1_47 = arith.constant 1 : index
    %c0_48 = arith.constant 0 : index
    %c0_49 = arith.constant 0 : index
    %c0_50 = arith.constant 0 : index
    %92 = vector.load %arg2[%c1_47, %c0_48, %c0_49, %c0_50] : memref<4x2x8x1xf32, #tpu.memory_space<vmem>>, vector<1x2x8x1xf32>
    %93 = vector.shape_cast %92 : vector<1x2x8x1xf32> to vector<2x8x1xf32>
    %94 = vector.extract_strided_slice %93 {offsets = [0, 0, 0], sizes = [1, 8, 1], strides = [1, 1, 1]} : vector<2x8x1xf32> to vector<1x8x1xf32>
    %cst_51 = arith.constant 9.99999974E-6 : f32
    %95 = vector.broadcast %cst_51 : f32 to vector<1x8x1xf32>
    %96 = arith.addf %91, %95 : vector<1x8x1xf32>
    %97 = math.rsqrt %96 : vector<1x8x1xf32>
    %98 = arith.mulf %94, %97 : vector<1x8x1xf32>
    %99 = vector.broadcast %98 : vector<1x8x1xf32> to vector<2x8x16xf32>
    %100 = arith.mulf %86, %99 : vector<2x8x16xf32>
    %101 = vector.extract_strided_slice %93 {offsets = [1, 0, 0], sizes = [1, 8, 1], strides = [1, 1, 1]} : vector<2x8x1xf32> to vector<1x8x1xf32>
    %102 = vector.broadcast %101 : vector<1x8x1xf32> to vector<2x8x16xf32>
    %103 = arith.addf %100, %102 : vector<2x8x16xf32>
    %cst_52 = arith.constant 0.000000e+00 : f32
    %104 = vector.broadcast %cst_52 : f32 to vector<2x8x16xf32>
    %105 = arith.maximumf %103, %104 : vector<2x8x16xf32>
    %cst_53 = arith.constant 0.000000e+00 : f32
    %106 = vector.broadcast %cst_53 : f32 to vector<2x8x1xf32>
    %107 = vector.extract_strided_slice %105 {offsets = [0, 0, 0], sizes = [2, 8, 15], strides = [1, 1, 1]} : vector<2x8x16xf32> to vector<2x8x15xf32>
    %108 = tpu.concatenate %106, %107 in 2 : vector<2x8x1xf32>, vector<2x8x15xf32> -> vector<2x8x16xf32>
    %c2_54 = arith.constant 2 : index
    %c0_55 = arith.constant 0 : index
    %c0_56 = arith.constant 0 : index
    %c0_57 = arith.constant 0 : index
    %109 = vector.load %arg1[%c2_54, %c0_55, %c0_56, %c0_57] : memref<4x3x8x8xf32, #tpu.memory_space<vmem>>, vector<1x1x8x8xf32>
    %110 = vector.shape_cast %109 : vector<1x1x8x8xf32> to vector<8x8xf32>
    %111 = vector.shape_cast %110 : vector<8x8xf32> to vector<1x8x8xf32>
    %112 = vector.shape_cast %111 : vector<1x8x8xf32> to vector<1x8x8xf32>
    %113 = vector.broadcast %112 : vector<1x8x8xf32> to vector<2x8x8xf32>
    %cst_58 = arith.constant dense<0.000000e+00> : vector<2x8x16xf32>
    %114 = tpu.matmul %113, %108, %cst_58 {dimension_numbers = #tpu.dot_dimension_numbers<[2], [1], [1], [2], [0, 0, 0, 1, 1, 2], [0], [0]>} : vector<2x8x8xf32>, vector<2x8x16xf32>, vector<2x8x16xf32> -> vector<2x8x16xf32>
    %c2_59 = arith.constant 2 : index
    %c1_60 = arith.constant 1 : index
    %c0_61 = arith.constant 0 : index
    %c0_62 = arith.constant 0 : index
    %115 = vector.load %arg1[%c2_59, %c1_60, %c0_61, %c0_62] : memref<4x3x8x8xf32, #tpu.memory_space<vmem>>, vector<1x1x8x8xf32>
    %116 = vector.shape_cast %115 : vector<1x1x8x8xf32> to vector<8x8xf32>
    %117 = vector.shape_cast %116 : vector<8x8xf32> to vector<1x8x8xf32>
    %118 = vector.shape_cast %117 : vector<1x8x8xf32> to vector<1x8x8xf32>
    %119 = vector.broadcast %118 : vector<1x8x8xf32> to vector<2x8x8xf32>
    %cst_63 = arith.constant dense<0.000000e+00> : vector<2x8x16xf32>
    %120 = tpu.matmul %119, %105, %cst_63 {dimension_numbers = #tpu.dot_dimension_numbers<[2], [1], [1], [2], [0, 0, 0, 1, 1, 2], [0], [0]>} : vector<2x8x8xf32>, vector<2x8x16xf32>, vector<2x8x16xf32> -> vector<2x8x16xf32>
    %121 = arith.addf %114, %120 : vector<2x8x16xf32>
    %cst_64 = arith.constant 0.000000e+00 : f32
    %122 = vector.broadcast %cst_64 : f32 to vector<2x8x1xf32>
    %123 = vector.extract_strided_slice %105 {offsets = [0, 0, 1], sizes = [2, 8, 15], strides = [1, 1, 1]} : vector<2x8x16xf32> to vector<2x8x15xf32>
    %124 = tpu.concatenate %123, %122 in 2 : vector<2x8x15xf32>, vector<2x8x1xf32> -> vector<2x8x16xf32>
    %c2_65 = arith.constant 2 : index
    %c2_66 = arith.constant 2 : index
    %c0_67 = arith.constant 0 : index
    %c0_68 = arith.constant 0 : index
    %125 = vector.load %arg1[%c2_65, %c2_66, %c0_67, %c0_68] : memref<4x3x8x8xf32, #tpu.memory_space<vmem>>, vector<1x1x8x8xf32>
    %126 = vector.shape_cast %125 : vector<1x1x8x8xf32> to vector<8x8xf32>
    %127 = vector.shape_cast %126 : vector<8x8xf32> to vector<1x8x8xf32>
    %128 = vector.shape_cast %127 : vector<1x8x8xf32> to vector<1x8x8xf32>
    %129 = vector.broadcast %128 : vector<1x8x8xf32> to vector<2x8x8xf32>
    %cst_69 = arith.constant dense<0.000000e+00> : vector<2x8x16xf32>
    %130 = tpu.matmul %129, %124, %cst_69 {dimension_numbers = #tpu.dot_dimension_numbers<[2], [1], [1], [2], [0, 0, 0, 1, 1, 2], [0], [0]>} : vector<2x8x8xf32>, vector<2x8x16xf32>, vector<2x8x16xf32> -> vector<2x8x16xf32>
    %131 = arith.addf %121, %130 : vector<2x8x16xf32>
    %cst_70 = arith.constant dense<0.000000e+00> : vector<8xf32>
    %132 = vector.multi_reduction <add>, %131, %cst_70 [0, 2] : vector<2x8x16xf32> to vector<8xf32>
    %133 = vector.shape_cast %132 : vector<8xf32> to vector<1x8x1xf32>
    %cst_71 = arith.constant 3.200000e+01 : f32
    %134 = vector.broadcast %cst_71 : f32 to vector<1x8x1xf32>
    %135 = arith.divf %133, %134 : vector<1x8x1xf32>
    %136 = vector.broadcast %135 : vector<1x8x1xf32> to vector<2x8x16xf32>
    %137 = arith.subf %131, %136 : vector<2x8x16xf32>
    %138 = arith.mulf %137, %137 : vector<2x8x16xf32>
    %cst_72 = arith.constant dense<0.000000e+00> : vector<8xf32>
    %139 = vector.multi_reduction <add>, %138, %cst_72 [0, 2] : vector<2x8x16xf32> to vector<8xf32>
    %140 = vector.shape_cast %139 : vector<8xf32> to vector<1x8x1xf32>
    %cst_73 = arith.constant 3.200000e+01 : f32
    %141 = vector.broadcast %cst_73 : f32 to vector<1x8x1xf32>
    %142 = arith.divf %140, %141 : vector<1x8x1xf32>
    %c2_74 = arith.constant 2 : index
    %c0_75 = arith.constant 0 : index
    %c0_76 = arith.constant 0 : index
    %c0_77 = arith.constant 0 : index
    %143 = vector.load %arg2[%c2_74, %c0_75, %c0_76, %c0_77] : memref<4x2x8x1xf32, #tpu.memory_space<vmem>>, vector<1x2x8x1xf32>
    %144 = vector.shape_cast %143 : vector<1x2x8x1xf32> to vector<2x8x1xf32>
    %145 = vector.extract_strided_slice %144 {offsets = [0, 0, 0], sizes = [1, 8, 1], strides = [1, 1, 1]} : vector<2x8x1xf32> to vector<1x8x1xf32>
    %cst_78 = arith.constant 9.99999974E-6 : f32
    %146 = vector.broadcast %cst_78 : f32 to vector<1x8x1xf32>
    %147 = arith.addf %142, %146 : vector<1x8x1xf32>
    %148 = math.rsqrt %147 : vector<1x8x1xf32>
    %149 = arith.mulf %145, %148 : vector<1x8x1xf32>
    %150 = vector.broadcast %149 : vector<1x8x1xf32> to vector<2x8x16xf32>
    %151 = arith.mulf %137, %150 : vector<2x8x16xf32>
    %152 = vector.extract_strided_slice %144 {offsets = [1, 0, 0], sizes = [1, 8, 1], strides = [1, 1, 1]} : vector<2x8x1xf32> to vector<1x8x1xf32>
    %153 = vector.broadcast %152 : vector<1x8x1xf32> to vector<2x8x16xf32>
    %154 = arith.addf %151, %153 : vector<2x8x16xf32>
    %cst_79 = arith.constant 0.000000e+00 : f32
    %155 = vector.broadcast %cst_79 : f32 to vector<2x8x16xf32>
    %156 = arith.maximumf %154, %155 : vector<2x8x16xf32>
    %cst_80 = arith.constant 0.000000e+00 : f32
    %157 = vector.broadcast %cst_80 : f32 to vector<2x8x1xf32>
    %158 = vector.extract_strided_slice %156 {offsets = [0, 0, 0], sizes = [2, 8, 15], strides = [1, 1, 1]} : vector<2x8x16xf32> to vector<2x8x15xf32>
    %159 = tpu.concatenate %157, %158 in 2 : vector<2x8x1xf32>, vector<2x8x15xf32> -> vector<2x8x16xf32>
    %c3 = arith.constant 3 : index
    %c0_81 = arith.constant 0 : index
    %c0_82 = arith.constant 0 : index
    %c0_83 = arith.constant 0 : index
    %160 = vector.load %arg1[%c3, %c0_81, %c0_82, %c0_83] : memref<4x3x8x8xf32, #tpu.memory_space<vmem>>, vector<1x1x8x8xf32>
    %161 = vector.shape_cast %160 : vector<1x1x8x8xf32> to vector<8x8xf32>
    %162 = vector.shape_cast %161 : vector<8x8xf32> to vector<1x8x8xf32>
    %163 = vector.shape_cast %162 : vector<1x8x8xf32> to vector<1x8x8xf32>
    %164 = vector.broadcast %163 : vector<1x8x8xf32> to vector<2x8x8xf32>
    %cst_84 = arith.constant dense<0.000000e+00> : vector<2x8x16xf32>
    %165 = tpu.matmul %164, %159, %cst_84 {dimension_numbers = #tpu.dot_dimension_numbers<[2], [1], [1], [2], [0, 0, 0, 1, 1, 2], [0], [0]>} : vector<2x8x8xf32>, vector<2x8x16xf32>, vector<2x8x16xf32> -> vector<2x8x16xf32>
    %c3_85 = arith.constant 3 : index
    %c1_86 = arith.constant 1 : index
    %c0_87 = arith.constant 0 : index
    %c0_88 = arith.constant 0 : index
    %166 = vector.load %arg1[%c3_85, %c1_86, %c0_87, %c0_88] : memref<4x3x8x8xf32, #tpu.memory_space<vmem>>, vector<1x1x8x8xf32>
    %167 = vector.shape_cast %166 : vector<1x1x8x8xf32> to vector<8x8xf32>
    %168 = vector.shape_cast %167 : vector<8x8xf32> to vector<1x8x8xf32>
    %169 = vector.shape_cast %168 : vector<1x8x8xf32> to vector<1x8x8xf32>
    %170 = vector.broadcast %169 : vector<1x8x8xf32> to vector<2x8x8xf32>
    %cst_89 = arith.constant dense<0.000000e+00> : vector<2x8x16xf32>
    %171 = tpu.matmul %170, %156, %cst_89 {dimension_numbers = #tpu.dot_dimension_numbers<[2], [1], [1], [2], [0, 0, 0, 1, 1, 2], [0], [0]>} : vector<2x8x8xf32>, vector<2x8x16xf32>, vector<2x8x16xf32> -> vector<2x8x16xf32>
    %172 = arith.addf %165, %171 : vector<2x8x16xf32>
    %cst_90 = arith.constant 0.000000e+00 : f32
    %173 = vector.broadcast %cst_90 : f32 to vector<2x8x1xf32>
    %174 = vector.extract_strided_slice %156 {offsets = [0, 0, 1], sizes = [2, 8, 15], strides = [1, 1, 1]} : vector<2x8x16xf32> to vector<2x8x15xf32>
    %175 = tpu.concatenate %174, %173 in 2 : vector<2x8x15xf32>, vector<2x8x1xf32> -> vector<2x8x16xf32>
    %c3_91 = arith.constant 3 : index
    %c2_92 = arith.constant 2 : index
    %c0_93 = arith.constant 0 : index
    %c0_94 = arith.constant 0 : index
    %176 = vector.load %arg1[%c3_91, %c2_92, %c0_93, %c0_94] : memref<4x3x8x8xf32, #tpu.memory_space<vmem>>, vector<1x1x8x8xf32>
    %177 = vector.shape_cast %176 : vector<1x1x8x8xf32> to vector<8x8xf32>
    %178 = vector.shape_cast %177 : vector<8x8xf32> to vector<1x8x8xf32>
    %179 = vector.shape_cast %178 : vector<1x8x8xf32> to vector<1x8x8xf32>
    %180 = vector.broadcast %179 : vector<1x8x8xf32> to vector<2x8x8xf32>
    %cst_95 = arith.constant dense<0.000000e+00> : vector<2x8x16xf32>
    %181 = tpu.matmul %180, %175, %cst_95 {dimension_numbers = #tpu.dot_dimension_numbers<[2], [1], [1], [2], [0, 0, 0, 1, 1, 2], [0], [0]>} : vector<2x8x8xf32>, vector<2x8x16xf32>, vector<2x8x16xf32> -> vector<2x8x16xf32>
    %182 = arith.addf %172, %181 : vector<2x8x16xf32>
    %cst_96 = arith.constant dense<0.000000e+00> : vector<8xf32>
    %183 = vector.multi_reduction <add>, %182, %cst_96 [0, 2] : vector<2x8x16xf32> to vector<8xf32>
    %184 = vector.shape_cast %183 : vector<8xf32> to vector<1x8x1xf32>
    %cst_97 = arith.constant 3.200000e+01 : f32
    %185 = vector.broadcast %cst_97 : f32 to vector<1x8x1xf32>
    %186 = arith.divf %184, %185 : vector<1x8x1xf32>
    %187 = vector.broadcast %186 : vector<1x8x1xf32> to vector<2x8x16xf32>
    %188 = arith.subf %182, %187 : vector<2x8x16xf32>
    %189 = arith.mulf %188, %188 : vector<2x8x16xf32>
    %cst_98 = arith.constant dense<0.000000e+00> : vector<8xf32>
    %190 = vector.multi_reduction <add>, %189, %cst_98 [0, 2] : vector<2x8x16xf32> to vector<8xf32>
    %191 = vector.shape_cast %190 : vector<8xf32> to vector<1x8x1xf32>
    %cst_99 = arith.constant 3.200000e+01 : f32
    %192 = vector.broadcast %cst_99 : f32 to vector<1x8x1xf32>
    %193 = arith.divf %191, %192 : vector<1x8x1xf32>
    %c3_100 = arith.constant 3 : index
    %c0_101 = arith.constant 0 : index
    %c0_102 = arith.constant 0 : index
    %c0_103 = arith.constant 0 : index
    %194 = vector.load %arg2[%c3_100, %c0_101, %c0_102, %c0_103] : memref<4x2x8x1xf32, #tpu.memory_space<vmem>>, vector<1x2x8x1xf32>
    %195 = vector.shape_cast %194 : vector<1x2x8x1xf32> to vector<2x8x1xf32>
    %196 = vector.extract_strided_slice %195 {offsets = [0, 0, 0], sizes = [1, 8, 1], strides = [1, 1, 1]} : vector<2x8x1xf32> to vector<1x8x1xf32>
    %cst_104 = arith.constant 9.99999974E-6 : f32
    %197 = vector.broadcast %cst_104 : f32 to vector<1x8x1xf32>
    %198 = arith.addf %193, %197 : vector<1x8x1xf32>
    %199 = math.rsqrt %198 : vector<1x8x1xf32>
    %200 = arith.mulf %196, %199 : vector<1x8x1xf32>
    %201 = vector.broadcast %200 : vector<1x8x1xf32> to vector<2x8x16xf32>
    %202 = arith.mulf %188, %201 : vector<2x8x16xf32>
    %203 = vector.extract_strided_slice %195 {offsets = [1, 0, 0], sizes = [1, 8, 1], strides = [1, 1, 1]} : vector<2x8x1xf32> to vector<1x8x1xf32>
    %204 = vector.broadcast %203 : vector<1x8x1xf32> to vector<2x8x16xf32>
    %205 = arith.addf %202, %204 : vector<2x8x16xf32>
    %cst_105 = arith.constant 0.000000e+00 : f32
    %206 = vector.broadcast %cst_105 : f32 to vector<2x8x16xf32>
    %207 = arith.maximumf %205, %206 : vector<2x8x16xf32>
    %208 = arith.addf %207, %54 : vector<2x8x16xf32>
    %c0_106 = arith.constant 0 : index
    %c0_107 = arith.constant 0 : index
    %c0_108 = arith.constant 0 : index
    %209 = vector.load %arg3[%c0_106, %c0_107, %c0_108] : memref<2x8x16xf32, #tpu.memory_space<vmem>>, vector<2x8x16xf32>
    tpu.vector_store %arg3[%c0_106, %c0_107, %c0_108], %208 {strides = array<i32>} : memref<2x8x16xf32, #tpu.memory_space<vmem>>, vector<2x8x16xf32>,
    return
  }
}

</mosaic_0001>

<llo_original>
// kernel: uencoder_forward.1
$region0: #{uencoder_forward.1}
  #allocation0 [shape = 'u32[]', space=smem, size = 0x4, offset = 0x4, fixed_abs, tag = 'smem constant byte address 0x4 - core index']
  #allocation1 [shape = 'u32[144,128]{1,0:T(1,128)}', space=vmem, size = 0x12000, scoped, tag = 'internal scratch']
  %s0 = inlined_call_operand.vmem [shape: f32[2,4,16], index: 0, kind: input, shape index: {}]
  %s1 = inlined_call_operand.hbm [shape: f32[4,3,8,8], index: 1, kind: input, shape index: {}]
  %s2 = inlined_call_operand.vmem [shape: f32[4,2,8,1], index: 2, kind: input, shape index: {}]
  %s3 = inlined_call_operand.hbm [shape: f32[2,8,16], index: 3, kind: output, shape index: {}]
  %s4 = sld [smem:[#allocation0]]
  $region26: #{uencoder_forward.1} parent=0
    _
  %s6 = ssub.s32 1, %s4
  %s7 = scalar_select 0, %s6, %s4
  $region1: #{uencoder_forward.1} parent=0
    #allocation2 [shape = 'u8[49152]{0}', space=vmem, size = 0xc000, scoped, tag = 'input window, operand 1, single buffered']
    #allocation3 [shape = 's32[1]{0}', space=sflag, size = 0x4, scoped, tag = 'scoped memory for uencoder_forward.1']
    #allocation4 [shape = 's32[1]{0}', space=sflag, size = 0x4, scoped, tag = 'scoped memory for uencoder_forward.1']
    #allocation5 [shape = 'u8[8192]{0}', space=vmem, size = 0x2000, scoped, tag = 'output window, operand 0, single buffered']
    %8 = vsyncpa [#allocation3], 0
    %9 = vsyncpa [#allocation4], 0
    // Predicated region
    $region2: #{uencoder_forward.1} parent=1 // pred_check
      _
    $region3: #{uencoder_forward.1} parent=1 // pred_check_branch
      %11 = sbr.rel (0) target = $region5
    $region4: #{uencoder_forward.1} parent=1 // pred_region
      _
    $region5: #{uencoder_forward.1} parent=1 // pred_fallthru
      _
    // Predicated region
    $region6: #{uencoder_forward.1} parent=1 // pred_check
      _
    $region7: #{uencoder_forward.1} parent=1 // pred_check_branch
      %13 = sbr.rel (0) target = $region9
    $region8: #{uencoder_forward.1} parent=1 // pred_region
      %s15 = ssub.s32 1536, 1536
      %16 = vsyncadd [#allocation3], %s15
      %s17 = sshll.u32 [#allocation2], 4
      %s18 = int_to_ptr.vmem [resolvable:$true] %s17
      %23 = dma.hbm_to_vmem [thread:$0]  %s1, 1536, %s18, [#allocation3], 128, 128, 8
    $region9: #{uencoder_forward.1} parent=1 // pred_fallthru
      _
    // Predicated region
    $region10: #{uencoder_forward.1} parent=1 // pred_check
      _
    $region11: #{uencoder_forward.1} parent=1 // pred_check_branch
      %25 = sbr.rel (0) target = $region13
    $region12: #{uencoder_forward.1} parent=1 // pred_region
      _
    $region13: #{uencoder_forward.1} parent=1 // pred_fallthru
      _
    // Predicated region
    $region14: #{uencoder_forward.1} parent=1 // pred_check
      _
    $region15: #{uencoder_forward.1} parent=1 // pred_check_branch
      %27 = sbr.rel (0) target = $region17
    $region16: #{uencoder_forward.1} parent=1 // pred_region
      %28 = dma.done [#allocation3], 1536
    $region17: #{uencoder_forward.1} parent=1 // pred_fallthru
      _
    %v29 = vld [vmem:[%s0] sm:$0xf]
    %v30 = vld [vmem:[%s0 + $0x4] sm:$0xf]
    %33 = vrot.lane.b32.xlu0 %v29, 1
    %v34 = vpop.permute.xlu0 %33
    %35 = vrot.lane.b32.xlu0 %v30, 1
    %v36 = vpop.permute.xlu0 %35
    %vm39 = vcmask 7168
    %v40 = vsel %vm39, 0.0, %v34
    %v41 = vsel %vm39, 0.0, %v36
    %v42 = vld [vmem:[#allocation2] sm:$0xff]
    %s43 = scalar_lea.vmem [#allocation2], 8
    %v44 = vld [vmem:[%s43] sm:$0xff]
    %vm45 = vcmask 31744
    %v47 = vsel %vm45, %v44, 0
    %vm49 = vcmask 1043456
    %v50 = vsel %vm49, %v29, 0
    %52 = vmatprep.subr.mxu0 0.0
    %53 = vmatpush1.msra.mxu0 %v50
    %54 = vmatprep.subr.mxu0 0.0
    %55 = vmatpush1.msra.mxu0 0.0
    %56 = vmatprep.subr.mxu0 0.0
    %57 = vmatpush1.msra.mxu0 0.0
    %58 = vmatprep.subr.mxu0 0.0
    %59 = vmatpush1.msra.mxu0 0.0
    %60 = vmatprep.subr.mxu0 0.0
    %61 = vmatpush1.msra.mxu0 0.0
    %62 = vmatprep.subr.mxu0 0.0
    %63 = vmatpush1.msra.mxu0 0.0
    %64 = vmatprep.subr.mxu0 0.0
    %65 = vmatpush1.msra.mxu0 0.0
    %66 = vmatprep.subr.mxu0 0.0
    %67 = vmatpush1.msra.mxu0 0.0
    %68 = vmatprep.subr.mxu0 0.0
    %69 = vmatpush1.msra.mxu0 0.0
    %70 = vmatprep.subr.mxu0 0.0
    %71 = vmatpush1.msra.mxu0 0.0
    %72 = vmatprep.subr.mxu0 0.0
    %73 = vmatpush1.msra.mxu0 0.0
    %74 = vmatprep.subr.mxu0 0.0
    %75 = vmatpush1.msra.mxu0 0.0
    %76 = vmatprep.subr.mxu0 0.0
    %77 = vmatpush1.msra.mxu0 0.0
    %78 = vmatprep.subr.mxu0 0.0
    %79 = vmatpush1.msra.mxu0 0.0
    %80 = vmatprep.subr.mxu0 0.0
    %81 = vmatpush1.msra.mxu0 0.0
    %82 = vmatprep.subr.mxu0 0.0
    %83 = vmatpush1.msra.mxu0 0.0
    %84 = vmatprep.subr.mxu0 0.0
    %85 = vmatpush1.msra.mxu0 0.0
    %86 = vmatprep.subr.mxu0 0.0
    %87 = vmatpush1.msra.mxu0 0.0
    %88 = vmatprep.subr.mxu0 0.0
    %89 = vmatpush1.msra.mxu0 0.0
    %90 = vmatprep.subr.mxu0 0.0
    %91 = vmatpush1.msra.mxu0 0.0
    %92 = vmatprep.subr.mxu0 0.0
    %93 = vmatpush1.msra.mxu0 0.0
    %94 = vmatprep.subr.mxu0 0.0
    %95 = vmatpush1.msra.mxu0 0.0
    %96 = vmatprep.subr.mxu0 0.0
    %97 = vmatpush1.msra.mxu0 0.0
    %98 = vmatprep.subr.mxu0 0.0
    %99 = vmatpush1.msra.mxu0 0.0
    %100 = vmatprep.subr.mxu0 0.0
    %101 = vmatpush1.msra.mxu0 0.0
    %102 = vmatprep.subr.mxu0 0.0
    %103 = vmatpush1.msra.mxu0 0.0
    %104 = vmatprep.subr.mxu0 0.0
    %105 = vmatpush1.msra.mxu0 0.0
    %106 = vmatprep.subr.mxu0 0.0
    %107 = vmatpush1.msra.mxu0 0.0
    %108 = vmatprep.subr.mxu0 0.0
    %109 = vmatpush1.msra.mxu0 0.0
    %110 = vmatprep.subr.mxu0 0.0
    %111 = vmatpush1.msra.mxu0 0.0
    %112 = vmatprep.subr.mxu0 0.0
    %113 = vmatpush1.msra.mxu0 0.0
    %114 = vmatprep.subr.mxu0 0.0
    %115 = vmatpush1.msra.mxu0 0.0
    %116 = vmatprep.mubr.f32.mxu0 0.0
    %117 = vmatmul.mubr.f32.gmra.mrb[0].mxu0 %v47
    %v118 = vpop.f32.mrb[0].mxu0
    %v119 = vadd.f32 0.0, %v118
    %v120 = vpop.f32.mrb[0].mxu0
    %121 = vdwg.mxu0
    %v122 = vsel %vm49, %v30, 0
    %124 = vmatprep.subr.mxu0 0.0
    %125 = vmatpush1.msra.mxu0 %v122
    %126 = vmatprep.subr.mxu0 0.0
    %127 = vmatpush1.msra.mxu0 0.0
    %128 = vmatprep.subr.mxu0 0.0
    %129 = vmatpush1.msra.mxu0 0.0
    %130 = vmatprep.subr.mxu0 0.0
    %131 = vmatpush1.msra.mxu0 0.0
    %132 = vmatprep.subr.mxu0 0.0
    %133 = vmatpush1.msra.mxu0 0.0
    %134 = vmatprep.subr.mxu0 0.0
    %135 = vmatpush1.msra.mxu0 0.0
    %136 = vmatprep.subr.mxu0 0.0
    %137 = vmatpush1.msra.mxu0 0.0
    %138 = vmatprep.subr.mxu0 0.0
    %139 = vmatpush1.msra.mxu0 0.0
    %140 = vmatprep.subr.mxu0 0.0
    %141 = vmatpush1.msra.mxu0 0.0
    %142 = vmatprep.subr.mxu0 0.0
    %143 = vmatpush1.msra.mxu0 0.0
    %144 = vmatprep.subr.mxu0 0.0
    %145 = vmatpush1.msra.mxu0 0.0
    %146 = vmatprep.subr.mxu0 0.0
    %147 = vmatpush1.msra.mxu0 0.0
    %148 = vmatprep.subr.mxu0 0.0
    %149 = vmatpush1.msra.mxu0 0.0
    %150 = vmatprep.subr.mxu0 0.0
    %151 = vmatpush1.msra.mxu0 0.0
    %152 = vmatprep.subr.mxu0 0.0
    %153 = vmatpush1.msra.mxu0 0.0
    %154 = vmatprep.subr.mxu0 0.0
    %155 = vmatpush1.msra.mxu0 0.0
    %156 = vmatprep.subr.mxu0 0.0
    %157 = vmatpush1.msra.mxu0 0.0
    %158 = vmatprep.subr.mxu0 0.0
    %159 = vmatpush1.msra.mxu0 0.0
    %160 = vmatprep.subr.mxu0 0.0
    %161 = vmatpush1.msra.mxu0 0.0
    %162 = vmatprep.subr.mxu0 0.0
    %163 = vmatpush1.msra.mxu0 0.0
    %164 = vmatprep.subr.mxu0 0.0
    %165 = vmatpush1.msra.mxu0 0.0
    %166 = vmatprep.subr.mxu0 0.0
    %167 = vmatpush1.msra.mxu0 0.0
    %168 = vmatprep.subr.mxu0 0.0
    %169 = vmatpush1.msra.mxu0 0.0
    %170 = vmatprep.subr.mxu0 0.0
    %171 = vmatpush1.msra.mxu0 0.0
    %172 = vmatprep.subr.mxu0 0.0
    %173 = vmatpush1.msra.mxu0 0.0
    %174 = vmatprep.subr.mxu0 0.0
    %175 = vmatpush1.msra.mxu0 0.0
    %176 = vmatprep.subr.mxu0 0.0
    %177 = vmatpush1.msra.mxu0 0.0
    %178 = vmatprep.subr.mxu0 0.0
    %179 = vmatpush1.msra.mxu0 0.0
    %180 = vmatprep.subr.mxu0 0.0
    %181 = vmatpush1.msra.mxu0 0.0
    %182 = vmatprep.subr.mxu0 0.0
    %183 = vmatpush1.msra.mxu0 0.0
    %184 = vmatprep.subr.mxu0 0.0
    %185 = vmatpush1.msra.mxu0 0.0
    %186 = vmatprep.subr.mxu0 0.0
    %187 = vmatpush1.msra.mxu0 0.0
    %188 = vmatprep.mubr.f32.mxu0 0.0
    %189 = vmatmul.mubr.f32.gmra.mrb[0].mxu0 %v47
    %v190 = vpop.f32.mrb[0].mxu0
    %v191 = vadd.f32 0.0, %v190
    %v192 = vpop.f32.mrb[0].mxu0
    %193 = vdwg.mxu0
    %v195 = vsel %vm45, %v42, 0
    %v198 = vsel %vm49, %v40, 0
    %200 = vmatprep.subr.mxu0 0.0
    %201 = vmatpush1.msra.mxu0 %v198
    %202 = vmatprep.subr.mxu0 0.0
    %203 = vmatpush1.msra.mxu0 0.0
    %204 = vmatprep.subr.mxu0 0.0
    %205 = vmatpush1.msra.mxu0 0.0
    %206 = vmatprep.subr.mxu0 0.0
    %207 = vmatpush1.msra.mxu0 0.0
    %208 = vmatprep.subr.mxu0 0.0
    %209 = vmatpush1.msra.mxu0 0.0
    %210 = vmatprep.subr.mxu0 0.0
    %211 = vmatpush1.msra.mxu0 0.0
    %212 = vmatprep.subr.mxu0 0.0
    %213 = vmatpush1.msra.mxu0 0.0
    %214 = vmatprep.subr.mxu0 0.0
    %215 = vmatpush1.msra.mxu0 0.0
    %216 = vmatprep.subr.mxu0 0.0
    %217 = vmatpush1.msra.mxu0 0.0
    %218 = vmatprep.subr.mxu0 0.0
    %219 = vmatpush1.msra.mxu0 0.0
    %220 = vmatprep.subr.mxu0 0.0
    %221 = vmatpush1.msra.mxu0 0.0
    %222 = vmatprep.subr.mxu0 0.0
    %223 = vmatpush1.msra.mxu0 0.0
    %224 = vmatprep.subr.mxu0 0.0
    %225 = vmatpush1.msra.mxu0 0.0
    %226 = vmatprep.subr.mxu0 0.0
    %227 = vmatpush1.msra.mxu0 0.0
    %228 = vmatprep.subr.mxu0 0.0
    %229 = vmatpush1.msra.mxu0 0.0
    %230 = vmatprep.subr.mxu0 0.0
    %231 = vmatpush1.msra.mxu0 0.0
    %232 = vmatprep.subr.mxu0 0.0
    %233 = vmatpush1.msra.mxu0 0.0
    %234 = vmatprep.subr.mxu0 0.0
    %235 = vmatpush1.msra.mxu0 0.0
    %236 = vmatprep.subr.mxu0 0.0
    %237 = vmatpush1.msra.mxu0 0.0
    %238 = vmatprep.subr.mxu0 0.0
    %239 = vmatpush1.msra.mxu0 0.0
    %240 = vmatprep.subr.mxu0 0.0
    %241 = vmatpush1.msra.mxu0 0.0
    %242 = vmatprep.subr.mxu0 0.0
    %243 = vmatpush1.msra.mxu0 0.0
    %244 = vmatprep.subr.mxu0 0.0
    %245 = vmatpush1.msra.mxu0 0.0
    %246 = vmatprep.subr.mxu0 0.0
    %247 = vmatpush1.msra.mxu0 0.0
    %248 = vmatprep.subr.mxu0 0.0
    %249 = vmatpush1.msra.mxu0 0.0
    %250 = vmatprep.subr.mxu0 0.0
    %251 = vmatpush1.msra.mxu0 0.0
    %252 = vmatprep.subr.mxu0 0.0
    %253 = vmatpush1.msra.mxu0 0.0
    %254 = vmatprep.subr.mxu0 0.0
    %255 = vmatpush1.msra.mxu0 0.0
    %256 = vmatprep.subr.mxu0 0.0
    %257 = vmatpush1.msra.mxu0 0.0
    %258 = vmatprep.subr.mxu0 0.0
    %259 = vmatpush1.msra.mxu0 0.0
    %260 = vmatprep.subr.mxu0 0.0
    %261 = vmatpush1.msra.mxu0 0.0
    %262 = vmatprep.subr.mxu0 0.0
    %263 = vmatpush1.msra.mxu0 0.0
    %264 = vmatprep.mubr.f32.mxu0 0.0
    %265 = vmatmul.mubr.f32.gmra.mrb[0].mxu0 %v195
    %v266 = vpop.f32.mrb[0].mxu0
    %v267 = vadd.f32 %v119, %v266
    %v268 = vpop.f32.mrb[0].mxu0
    %269 = vdwg.mxu0
    %v271 = vsel %vm49, %v41, 0
    %273 = vmatprep.subr.mxu0 0.0
    %274 = vmatpush1.msra.mxu0 %v271
    %275 = vmatprep.subr.mxu0 0.0
    %276 = vmatpush1.msra.mxu0 0.0
    %277 = vmatprep.subr.mxu0 0.0
    %278 = vmatpush1.msra.mxu0 0.0
    %279 = vmatprep.subr.mxu0 0.0
    %280 = vmatpush1.msra.mxu0 0.0
    %281 = vmatprep.subr.mxu0 0.0
    %282 = vmatpush1.msra.mxu0 0.0
    %283 = vmatprep.subr.mxu0 0.0
    %284 = vmatpush1.msra.mxu0 0.0
    %285 = vmatprep.subr.mxu0 0.0
    %286 = vmatpush1.msra.mxu0 0.0
    %287 = vmatprep.subr.mxu0 0.0
    %288 = vmatpush1.msra.mxu0 0.0
    %289 = vmatprep.subr.mxu0 0.0
    %290 = vmatpush1.msra.mxu0 0.0
    %291 = vmatprep.subr.mxu0 0.0
    %292 = vmatpush1.msra.mxu0 0.0
    %293 = vmatprep.subr.mxu0 0.0
    %294 = vmatpush1.msra.mxu0 0.0
    %295 = vmatprep.subr.mxu0 0.0
    %296 = vmatpush1.msra.mxu0 0.0
    %297 = vmatprep.subr.mxu0 0.0
    %298 = vmatpush1.msra.mxu0 0.0
    %299 = vmatprep.subr.mxu0 0.0
    %300 = vmatpush1.msra.mxu0 0.0
    %301 = vmatprep.subr.mxu0 0.0
    %302 = vmatpush1.msra.mxu0 0.0
    %303 = vmatprep.subr.mxu0 0.0
    %304 = vmatpush1.msra.mxu0 0.0
    %305 = vmatprep.subr.mxu0 0.0
    %306 = vmatpush1.msra.mxu0 0.0
    %307 = vmatprep.subr.mxu0 0.0
    %308 = vmatpush1.msra.mxu0 0.0
    %309 = vmatprep.subr.mxu0 0.0
    %310 = vmatpush1.msra.mxu0 0.0
    %311 = vmatprep.subr.mxu0 0.0
    %312 = vmatpush1.msra.mxu0 0.0
    %313 = vmatprep.subr.mxu0 0.0
    %314 = vmatpush1.msra.mxu0 0.0
    %315 = vmatprep.subr.mxu0 0.0
    %316 = vmatpush1.msra.mxu0 0.0
    %317 = vmatprep.subr.mxu0 0.0
    %318 = vmatpush1.msra.mxu0 0.0
    %319 = vmatprep.subr.mxu0 0.0
    %320 = vmatpush1.msra.mxu0 0.0
    %321 = vmatprep.subr.mxu0 0.0
    %322 = vmatpush1.msra.mxu0 0.0
    %323 = vmatprep.subr.mxu0 0.0
    %324 = vmatpush1.msra.mxu0 0.0
    %325 = vmatprep.subr.mxu0 0.0
    %326 = vmatpush1.msra.mxu0 0.0
    %327 = vmatprep.subr.mxu0 0.0
    %328 = vmatpush1.msra.mxu0 0.0
    %329 = vmatprep.subr.mxu0 0.0
    %330 = vmatpush1.msra.mxu0 0.0
    %331 = vmatprep.subr.mxu0 0.0
    %332 = vmatpush1.msra.mxu0 0.0
    %333 = vmatprep.subr.mxu0 0.0
    %334 = vmatpush1.msra.mxu0 0.0
    %335 = vmatprep.subr.mxu0 0.0
    %336 = vmatpush1.msra.mxu0 0.0
    %337 = vmatprep.mubr.f32.mxu0 0.0
    %338 = vmatmul.mubr.f32.gmra.mrb[0].mxu0 %v195
    %v339 = vpop.f32.mrb[0].mxu0
    %v340 = vadd.f32 %v191, %v339
    %v341 = vpop.f32.mrb[0].mxu0
    %342 = vdwg.mxu0
    %343 = vrot.lane.b32.xlu0 %v29, 127
    %v344 = vpop.permute.xlu0 %343
    %345 = vrot.lane.b32.xlu0 %v30, 127
    %v346 = vpop.permute.xlu0 %345
    %vm349 = vcmask 121856
    %v350 = vsel %vm349, %v344, 0.0
    %v351 = vsel %vm349, %v346, 0.0
    %s352 = scalar_lea.vmem [#allocation2], 16
    %v353 = vld [vmem:[%s352] sm:$0xff]
    %v355 = vsel %vm45, %v353, 0
    %v358 = vsel %vm49, %v350, 0
    %360 = vmatprep.subr.mxu0 0.0
    %361 = vmatpush1.msra.mxu0 %v358
    %362 = vmatprep.subr.mxu0 0.0
    %363 = vmatpush1.msra.mxu0 0.0
    %364 = vmatprep.subr.mxu0 0.0
    %365 = vmatpush1.msra.mxu0 0.0
    %366 = vmatprep.subr.mxu0 0.0
    %367 = vmatpush1.msra.mxu0 0.0
    %368 = vmatprep.subr.mxu0 0.0
    %369 = vmatpush1.msra.mxu0 0.0
    %370 = vmatprep.subr.mxu0 0.0
    %371 = vmatpush1.msra.mxu0 0.0
    %372 = vmatprep.subr.mxu0 0.0
    %373 = vmatpush1.msra.mxu0 0.0
    %374 = vmatprep.subr.mxu0 0.0
    %375 = vmatpush1.msra.mxu0 0.0
    %376 = vmatprep.subr.mxu0 0.0
    %377 = vmatpush1.msra.mxu0 0.0
    %378 = vmatprep.subr.mxu0 0.0
    %379 = vmatpush1.msra.mxu0 0.0
    %380 = vmatprep.subr.mxu0 0.0
    %381 = vmatpush1.msra.mxu0 0.0
    %382 = vmatprep.subr.mxu0 0.0
    %383 = vmatpush1.msra.mxu0 0.0
    %384 = vmatprep.subr.mxu0 0.0
    %385 = vmatpush1.msra.mxu0 0.0
    %386 = vmatprep.subr.mxu0 0.0
    %387 = vmatpush1.msra.mxu0 0.0
    %388 = vmatprep.subr.mxu0 0.0
    %389 = vmatpush1.msra.mxu0 0.0
    %390 = vmatprep.subr.mxu0 0.0
    %391 = vmatpush1.msra.mxu0 0.0
    %392 = vmatprep.subr.mxu0 0.0
    %393 = vmatpush1.msra.mxu0 0.0
    %394 = vmatprep.subr.mxu0 0.0
    %395 = vmatpush1.msra.mxu0 0.0
    %396 = vmatprep.subr.mxu0 0.0
    %397 = vmatpush1.msra.mxu0 0.0
    %398 = vmatprep.subr.mxu0 0.0
    %399 = vmatpush1.msra.mxu0 0.0
    %400 = vmatprep.subr.mxu0 0.0
    %401 = vmatpush1.msra.mxu0 0.0
    %402 = vmatprep.subr.mxu0 0.0
    %403 = vmatpush1.msra.mxu0 0.0
    %404 = vmatprep.subr.mxu0 0.0
    %405 = vmatpush1.msra.mxu0 0.0
    %406 = vmatprep.subr.mxu0 0.0
    %407 = vmatpush1.msra.mxu0 0.0
    %408 = vmatprep.subr.mxu0 0.0
    %409 = vmatpush1.msra.mxu0 0.0
    %410 = vmatprep.subr.mxu0 0.0
    %411 = vmatpush1.msra.mxu0 0.0
    %412 = vmatprep.subr.mxu0 0.0
    %413 = vmatpush1.msra.mxu0 0.0
    %414 = vmatprep.subr.mxu0 0.0
    %415 = vmatpush1.msra.mxu0 0.0
    %416 = vmatprep.subr.mxu0 0.0
    %417 = vmatpush1.msra.mxu0 0.0
    %418 = vmatprep.subr.mxu0 0.0
    %419 = vmatpush1.msra.mxu0 0.0
    %420 = vmatprep.subr.mxu0 0.0
    %421 = vmatpush1.msra.mxu0 0.0
    %422 = vmatprep.subr.mxu0 0.0
    %423 = vmatpush1.msra.mxu0 0.0
    %424 = vmatprep.mubr.f32.mxu0 0.0
    %425 = vmatmul.mubr.f32.gmra.mrb[0].mxu0 %v355
    %v426 = vpop.f32.mrb[0].mxu0
    %v427 = vadd.f32 0.0, %v426
    %v428 = vpop.f32.mrb[0].mxu0
    %429 = vdwg.mxu0
    %v431 = vsel %vm49, %v351, 0
    %433 = vmatprep.subr.mxu0 0.0
    %434 = vmatpush1.msra.mxu0 %v431
    %435 = vmatprep.subr.mxu0 0.0
    %436 = vmatpush1.msra.mxu0 0.0
    %437 = vmatprep.subr.mxu0 0.0
    %438 = vmatpush1.msra.mxu0 0.0
    %439 = vmatprep.subr.mxu0 0.0
    %440 = vmatpush1.msra.mxu0 0.0
    %441 = vmatprep.subr.mxu0 0.0
    %442 = vmatpush1.msra.mxu0 0.0
    %443 = vmatprep.subr.mxu0 0.0
    %444 = vmatpush1.msra.mxu0 0.0
    %445 = vmatprep.subr.mxu0 0.0
    %446 = vmatpush1.msra.mxu0 0.0
    %447 = vmatprep.subr.mxu0 0.0
    %448 = vmatpush1.msra.mxu0 0.0
    %449 = vmatprep.subr.mxu0 0.0
    %450 = vmatpush1.msra.mxu0 0.0
    %451 = vmatprep.subr.mxu0 0.0
    %452 = vmatpush1.msra.mxu0 0.0
    %453 = vmatprep.subr.mxu0 0.0
    %454 = vmatpush1.msra.mxu0 0.0
    %455 = vmatprep.subr.mxu0 0.0
    %456 = vmatpush1.msra.mxu0 0.0
    %457 = vmatprep.subr.mxu0 0.0
    %458 = vmatpush1.msra.mxu0 0.0
    %459 = vmatprep.subr.mxu0 0.0
    %460 = vmatpush1.msra.mxu0 0.0
    %461 = vmatprep.subr.mxu0 0.0
    %462 = vmatpush1.msra.mxu0 0.0
    %463 = vmatprep.subr.mxu0 0.0
    %464 = vmatpush1.msra.mxu0 0.0
    %465 = vmatprep.subr.mxu0 0.0
    %466 = vmatpush1.msra.mxu0 0.0
    %467 = vmatprep.subr.mxu0 0.0
    %468 = vmatpush1.msra.mxu0 0.0
    %469 = vmatprep.subr.mxu0 0.0
    %470 = vmatpush1.msra.mxu0 0.0
    %471 = vmatprep.subr.mxu0 0.0
    %472 = vmatpush1.msra.mxu0 0.0
    %473 = vmatprep.subr.mxu0 0.0
    %474 = vmatpush1.msra.mxu0 0.0
    %475 = vmatprep.subr.mxu0 0.0
    %476 = vmatpush1.msra.mxu0 0.0
    %477 = vmatprep.subr.mxu0 0.0
    %478 = vmatpush1.msra.mxu0 0.0
    %479 = vmatprep.subr.mxu0 0.0
    %480 = vmatpush1.msra.mxu0 0.0
    %481 = vmatprep.subr.mxu0 0.0
    %482 = vmatpush1.msra.mxu0 0.0
    %483 = vmatprep.subr.mxu0 0.0
    %484 = vmatpush1.msra.mxu0 0.0
    %485 = vmatprep.subr.mxu0 0.0
    %486 = vmatpush1.msra.mxu0 0.0
    %487 = vmatprep.subr.mxu0 0.0
    %488 = vmatpush1.msra.mxu0 0.0
    %489 = vmatprep.subr.mxu0 0.0
    %490 = vmatpush1.msra.mxu0 0.0
    %491 = vmatprep.subr.mxu0 0.0
    %492 = vmatpush1.msra.mxu0 0.0
    %493 = vmatprep.subr.mxu0 0.0
    %494 = vmatpush1.msra.mxu0 0.0
    %495 = vmatprep.subr.mxu0 0.0
    %496 = vmatpush1.msra.mxu0 0.0
    %497 = vmatprep.mubr.f32.mxu0 0.0
    %498 = vmatmul.mubr.f32.gmra.mrb[0].mxu0 %v355
    %v499 = vpop.f32.mrb[0].mxu0
    %v500 = vadd.f32 0.0, %v499
    %v501 = vpop.f32.mrb[0].mxu0
    %502 = vdwg.mxu0
    %v503 = vadd.f32 %v267, %v427
    %v504 = vadd.f32 %v340, %v500
    %vm505 = vcmask 130048
    %v506 = vsel %vm505, %v503, 0.0
    %v507 = vsel %vm505, %v504, 0.0
    %v508 = vadd.f32 %v506, %v507
    %509 = vadd.xlane.f32.xlu0 %v508
    %v510 = vpop.xlane.xlu0 %509
    %v511 = vrcp.pop 32.0
    %v512 = vmul.f32 %v510, %v511
    %v513 = vsub.f32 %v503, %v512
    %v514 = vsub.f32 %v504, %v512
    %v515 = vmul.f32 %v513, %v513
    %v516 = vmul.f32 %v514, %v514
    %v517 = vsel %vm505, %v515, 0.0
    %v518 = vsel %vm505, %v516, 0.0
    %v519 = vadd.f32 %v517, %v518
    %520 = vadd.xlane.f32.xlu0 %v519
    %v521 = vpop.xlane.xlu0 %520
    %v522 = vmul.f32 %v521, %v511
    %v523 = vld [vmem:[%s2] sm:$0xff]
    %v524 = vld [vmem:[%s2 + $0x8] sm:$0xff]
    %v525 = vadd.f32 %v522, 1e-05
    %v526 = vrsqrt.pop %v525
    %v527 = vmul.f32 %v523, %v526
    %529 = vset.pattern.permute.xlu0 0
    %530 = vperm.xlu0 %529, %v527
    %v531 = vpop.permute.xlu0 %530
    %v533 = vmul.f32 %v513, %v531
    %v534 = vmul.f32 %v514, %v531
    %536 = vset.pattern.permute.xlu0 0
    %537 = vperm.xlu0 %536, %v524
    %v538 = vpop.permute.xlu0 %537
    %v540 = vadd.f32 %v533, %v538
    %v541 = vadd.f32 %v534, %v538
    %v542 = vmax.f32 %v540, 0.0
    %v543 = vmax.f32 %v541, 0.0
    %546 = vrot.lane.b32.xlu0 %v542, 1
    %v547 = vpop.permute.xlu0 %546
    %548 = vrot.lane.b32.xlu0 %v543, 1
    %v549 = vpop.permute.xlu0 %548
    %v552 = vsel %vm39, 0.0, %v547
    %v553 = vsel %vm39, 0.0, %v549
    %s554 = scalar_lea.vmem [#allocation2], 24
    %v555 = vld [vmem:[%s554] sm:$0xff]
    %s556 = scalar_lea.vmem [#allocation2], 32
    %v557 = vld [vmem:[%s556] sm:$0xff]
    %vm558 = vcmask 64512
    %v560 = vsel %vm558, %v557, 0
    %562 = vmatprep.subr.mxu0 0.0
    %563 = vmatpush1.msra.mxu0 %v542
    %564 = vmatprep.subr.mxu0 0.0
    %565 = vmatpush1.msra.mxu0 0.0
    %566 = vmatprep.subr.mxu0 0.0
    %567 = vmatpush1.msra.mxu0 0.0
    %568 = vmatprep.subr.mxu0 0.0
    %569 = vmatpush1.msra.mxu0 0.0
    %570 = vmatprep.subr.mxu0 0.0
    %571 = vmatpush1.msra.mxu0 0.0
    %572 = vmatprep.subr.mxu0 0.0
    %573 = vmatpush1.msra.mxu0 0.0
    %574 = vmatprep.subr.mxu0 0.0
    %575 = vmatpush1.msra.mxu0 0.0
    %576 = vmatprep.subr.mxu0 0.0
    %577 = vmatpush1.msra.mxu0 0.0
    %578 = vmatprep.subr.mxu0 0.0
    %579 = vmatpush1.msra.mxu0 0.0
    %580 = vmatprep.subr.mxu0 0.0
    %581 = vmatpush1.msra.mxu0 0.0
    %582 = vmatprep.subr.mxu0 0.0
    %583 = vmatpush1.msra.mxu0 0.0
    %584 = vmatprep.subr.mxu0 0.0
    %585 = vmatpush1.msra.mxu0 0.0
    %586 = vmatprep.subr.mxu0 0.0
    %587 = vmatpush1.msra.mxu0 0.0
    %588 = vmatprep.subr.mxu0 0.0
    %589 = vmatpush1.msra.mxu0 0.0
    %590 = vmatprep.subr.mxu0 0.0
    %591 = vmatpush1.msra.mxu0 0.0
    %592 = vmatprep.subr.mxu0 0.0
    %593 = vmatpush1.msra.mxu0 0.0
    %594 = vmatprep.subr.mxu0 0.0
    %595 = vmatpush1.msra.mxu0 0.0
    %596 = vmatprep.subr.mxu0 0.0
    %597 = vmatpush1.msra.mxu0 0.0
    %598 = vmatprep.subr.mxu0 0.0
    %599 = vmatpush1.msra.mxu0 0.0
    %600 = vmatprep.subr.mxu0 0.0
    %601 = vmatpush1.msra.mxu0 0.0
    %602 = vmatprep.subr.mxu0 0.0
    %603 = vmatpush1.msra.mxu0 0.0
    %604 = vmatprep.subr.mxu0 0.0
    %605 = vmatpush1.msra.mxu0 0.0
    %606 = vmatprep.subr.mxu0 0.0
    %607 = vmatpush1.msra.mxu0 0.0
    %608 = vmatprep.subr.mxu0 0.0
    %609 = vmatpush1.msra.mxu0 0.0
    %610 = vmatprep.subr.mxu0 0.0
    %611 = vmatpush1.msra.mxu0 0.0
    %612 = vmatprep.subr.mxu0 0.0
    %613 = vmatpush1.msra.mxu0 0.0
    %614 = vmatprep.subr.mxu0 0.0
    %615 = vmatpush1.msra.mxu0 0.0
    %616 = vmatprep.subr.mxu0 0.0
    %617 = vmatpush1.msra.mxu0 0.0
    %618 = vmatprep.subr.mxu0 0.0
    %619 = vmatpush1.msra.mxu0 0.0
    %620 = vmatprep.subr.mxu0 0.0
    %621 = vmatpush1.msra.mxu0 0.0
    %622 = vmatprep.subr.mxu0 0.0
    %623 = vmatpush1.msra.mxu0 0.0
    %624 = vmatprep.subr.mxu0 0.0
    %625 = vmatpush1.msra.mxu0 0.0
    %626 = vmatprep.mubr.f32.mxu0 0.0
    %627 = vmatmul.mubr.f32.gmra.mrb[0].mxu0 %v560
    %v628 = vpop.f32.mrb[0].mxu0
    %v629 = vadd.f32 0.0, %v628
    %v630 = vpop.f32.mrb[0].mxu0
    %631 = vdwg.mxu0
    %632 = vmatprep.subr.mxu0 0.0
    %633 = vmatpush1.msra.mxu0 %v543
    %634 = vmatprep.subr.mxu0 0.0
    %635 = vmatpush1.msra.mxu0 0.0
    %636 = vmatprep.subr.mxu0 0.0
    %637 = vmatpush1.msra.mxu0 0.0
    %638 = vmatprep.subr.mxu0 0.0
    %639 = vmatpush1.msra.mxu0 0.0
    %640 = vmatprep.subr.mxu0 0.0
    %641 = vmatpush1.msra.mxu0 0.0
    %642 = vmatprep.subr.mxu0 0.0
    %643 = vmatpush1.msra.mxu0 0.0
    %644 = vmatprep.subr.mxu0 0.0
    %645 = vmatpush1.msra.mxu0 0.0
    %646 = vmatprep.subr.mxu0 0.0
    %647 = vmatpush1.msra.mxu0 0.0
    %648 = vmatprep.subr.mxu0 0.0
    %649 = vmatpush1.msra.mxu0 0.0
    %650 = vmatprep.subr.mxu0 0.0
    %651 = vmatpush1.msra.mxu0 0.0
    %652 = vmatprep.subr.mxu0 0.0
    %653 = vmatpush1.msra.mxu0 0.0
    %654 = vmatprep.subr.mxu0 0.0
    %655 = vmatpush1.msra.mxu0 0.0
    %656 = vmatprep.subr.mxu0 0.0
    %657 = vmatpush1.msra.mxu0 0.0
    %658 = vmatprep.subr.mxu0 0.0
    %659 = vmatpush1.msra.mxu0 0.0
    %660 = vmatprep.subr.mxu0 0.0
    %661 = vmatpush1.msra.mxu0 0.0
    %662 = vmatprep.subr.mxu0 0.0
    %663 = vmatpush1.msra.mxu0 0.0
    %664 = vmatprep.subr.mxu0 0.0
    %665 = vmatpush1.msra.mxu0 0.0
    %666 = vmatprep.subr.mxu0 0.0
    %667 = vmatpush1.msra.mxu0 0.0
    %668 = vmatprep.subr.mxu0 0.0
    %669 = vmatpush1.msra.mxu0 0.0
    %670 = vmatprep.subr.mxu0 0.0
    %671 = vmatpush1.msra.mxu0 0.0
    %672 = vmatprep.subr.mxu0 0.0
    %673 = vmatpush1.msra.mxu0 0.0
    %674 = vmatprep.subr.mxu0 0.0
    %675 = vmatpush1.msra.mxu0 0.0
    %676 = vmatprep.subr.mxu0 0.0
    %677 = vmatpush1.msra.mxu0 0.0
    %678 = vmatprep.subr.mxu0 0.0
    %679 = vmatpush1.msra.mxu0 0.0
    %680 = vmatprep.subr.mxu0 0.0
    %681 = vmatpush1.msra.mxu0 0.0
    %682 = vmatprep.subr.mxu0 0.0
    %683 = vmatpush1.msra.mxu0 0.0
    %684 = vmatprep.subr.mxu0 0.0
    %685 = vmatpush1.msra.mxu0 0.0
    %686 = vmatprep.subr.mxu0 0.0
    %687 = vmatpush1.msra.mxu0 0.0
    %688 = vmatprep.subr.mxu0 0.0
    %689 = vmatpush1.msra.mxu0 0.0
    %690 = vmatprep.subr.mxu0 0.0
    %691 = vmatpush1.msra.mxu0 0.0
    %692 = vmatprep.subr.mxu0 0.0
    %693 = vmatpush1.msra.mxu0 0.0
    %694 = vmatprep.subr.mxu0 0.0
    %695 = vmatpush1.msra.mxu0 0.0
    %696 = vmatprep.mubr.f32.mxu0 0.0
    %697 = vmatmul.mubr.f32.gmra.mrb[0].mxu0 %v560
    %v698 = vpop.f32.mrb[0].mxu0
    %v699 = vadd.f32 0.0, %v698
    %v700 = vpop.f32.mrb[0].mxu0
    %701 = vdwg.mxu0
    %v703 = vsel %vm558, %v555, 0
    %705 = vmatprep.subr.mxu0 0.0
    %706 = vmatpush1.msra.mxu0 %v552
    %707 = vmatprep.subr.mxu0 0.0
    %708 = vmatpush1.msra.mxu0 0.0
    %709 = vmatprep.subr.mxu0 0.0
    %710 = vmatpush1.msra.mxu0 0.0
    %711 = vmatprep.subr.mxu0 0.0
    %712 = vmatpush1.msra.mxu0 0.0
    %713 = vmatprep.subr.mxu0 0.0
    %714 = vmatpush1.msra.mxu0 0.0
    %715 = vmatprep.subr.mxu0 0.0
    %716 = vmatpush1.msra.mxu0 0.0
    %717 = vmatprep.subr.mxu0 0.0
    %718 = vmatpush1.msra.mxu0 0.0
    %719 = vmatprep.subr.mxu0 0.0
    %720 = vmatpush1.msra.mxu0 0.0
    %721 = vmatprep.subr.mxu0 0.0
    %722 = vmatpush1.msra.mxu0 0.0
    %723 = vmatprep.subr.mxu0 0.0
    %724 = vmatpush1.msra.mxu0 0.0
    %725 = vmatprep.subr.mxu0 0.0
    %726 = vmatpush1.msra.mxu0 0.0
    %727 = vmatprep.subr.mxu0 0.0
    %728 = vmatpush1.msra.mxu0 0.0
    %729 = vmatprep.subr.mxu0 0.0
    %730 = vmatpush1.msra.mxu0 0.0
    %731 = vmatprep.subr.mxu0 0.0
    %732 = vmatpush1.msra.mxu0 0.0
    %733 = vmatprep.subr.mxu0 0.0
    %734 = vmatpush1.msra.mxu0 0.0
    %735 = vmatprep.subr.mxu0 0.0
    %736 = vmatpush1.msra.mxu0 0.0
    %737 = vmatprep.subr.mxu0 0.0
    %738 = vmatpush1.msra.mxu0 0.0
    %739 = vmatprep.subr.mxu0 0.0
    %740 = vmatpush1.msra.mxu0 0.0
    %741 = vmatprep.subr.mxu0 0.0
    %742 = vmatpush1.msra.mxu0 0.0
    %743 = vmatprep.subr.mxu0 0.0
    %744 = vmatpush1.msra.mxu0 0.0
    %745 = vmatprep.subr.mxu0 0.0
    %746 = vmatpush1.msra.mxu0 0.0
    %747 = vmatprep.subr.mxu0 0.0
    %748 = vmatpush1.msra.mxu0 0.0
    %749 = vmatprep.subr.mxu0 0.0
    %750 = vmatpush1.msra.mxu0 0.0
    %751 = vmatprep.subr.mxu0 0.0
    %752 = vmatpush1.msra.mxu0 0.0
    %753 = vmatprep.subr.mxu0 0.0
    %754 = vmatpush1.msra.mxu0 0.0
    %755 = vmatprep.subr.mxu0 0.0
    %756 = vmatpush1.msra.mxu0 0.0
    %757 = vmatprep.subr.mxu0 0.0
    %758 = vmatpush1.msra.mxu0 0.0
    %759 = vmatprep.subr.mxu0 0.0
    %760 = vmatpush1.msra.mxu0 0.0
    %761 = vmatprep.subr.mxu0 0.0
    %762 = vmatpush1.msra.mxu0 0.0
    %763 = vmatprep.subr.mxu0 0.0
    %764 = vmatpush1.msra.mxu0 0.0
    %765 = vmatprep.subr.mxu0 0.0
    %766 = vmatpush1.msra.mxu0 0.0
    %767 = vmatprep.subr.mxu0 0.0
    %768 = vmatpush1.msra.mxu0 0.0
    %769 = vmatprep.mubr.f32.mxu0 0.0
    %770 = vmatmul.mubr.f32.gmra.mrb[0].mxu0 %v703
    %v771 = vpop.f32.mrb[0].mxu0
    %v772 = vadd.f32 %v629, %v771
    %v773 = vpop.f32.mrb[0].mxu0
    %774 = vdwg.mxu0
    %775 = vmatprep.subr.mxu0 0.0
    %776 = vmatpush1.msra.mxu0 %v553
    %777 = vmatprep.subr.mxu0 0.0
    %778 = vmatpush1.msra.mxu0 0.0
    %779 = vmatprep.subr.mxu0 0.0
    %780 = vmatpush1.msra.mxu0 0.0
    %781 = vmatprep.subr.mxu0 0.0
    %782 = vmatpush1.msra.mxu0 0.0
    %783 = vmatprep.subr.mxu0 0.0
    %784 = vmatpush1.msra.mxu0 0.0
    %785 = vmatprep.subr.mxu0 0.0
    %786 = vmatpush1.msra.mxu0 0.0
    %787 = vmatprep.subr.mxu0 0.0
    %788 = vmatpush1.msra.mxu0 0.0
    %789 = vmatprep.subr.mxu0 0.0
    %790 = vmatpush1.msra.mxu0 0.0
    %791 = vmatprep.subr.mxu0 0.0
    %792 = vmatpush1.msra.mxu0 0.0
    %793 = vmatprep.subr.mxu0 0.0
    %794 = vmatpush1.msra.mxu0 0.0
    %795 = vmatprep.subr.mxu0 0.0
    %796 = vmatpush1.msra.mxu0 0.0
    %797 = vmatprep.subr.mxu0 0.0
    %798 = vmatpush1.msra.mxu0 0.0
    %799 = vmatprep.subr.mxu0 0.0
    %800 = vmatpush1.msra.mxu0 0.0
    %801 = vmatprep.subr.mxu0 0.0
    %802 = vmatpush1.msra.mxu0 0.0
    %803 = vmatprep.subr.mxu0 0.0
    %804 = vmatpush1.msra.mxu0 0.0
    %805 = vmatprep.subr.mxu0 0.0
    %806 = vmatpush1.msra.mxu0 0.0
    %807 = vmatprep.subr.mxu0 0.0
    %808 = vmatpush1.msra.mxu0 0.0
    %809 = vmatprep.subr.mxu0 0.0
    %810 = vmatpush1.msra.mxu0 0.0
    %811 = vmatprep.subr.mxu0 0.0
    %812 = vmatpush1.msra.mxu0 0.0
    %813 = vmatprep.subr.mxu0 0.0
    %814 = vmatpush1.msra.mxu0 0.0
    %815 = vmatprep.subr.mxu0 0.0
    %816 = vmatpush1.msra.mxu0 0.0
    %817 = vmatprep.subr.mxu0 0.0
    %818 = vmatpush1.msra.mxu0 0.0
    %819 = vmatprep.subr.mxu0 0.0
    %820 = vmatpush1.msra.mxu0 0.0
    %821 = vmatprep.subr.mxu0 0.0
    %822 = vmatpush1.msra.mxu0 0.0
    %823 = vmatprep.subr.mxu0 0.0
    %824 = vmatpush1.msra.mxu0 0.0
    %825 = vmatprep.subr.mxu0 0.0
    %826 = vmatpush1.msra.mxu0 0.0
    %827 = vmatprep.subr.mxu0 0.0
    %828 = vmatpush1.msra.mxu0 0.0
    %829 = vmatprep.subr.mxu0 0.0
    %830 = vmatpush1.msra.mxu0 0.0
    %831 = vmatprep.subr.mxu0 0.0
    %832 = vmatpush1.msra.mxu0 0.0
    %833 = vmatprep.subr.mxu0 0.0
    %834 = vmatpush1.msra.mxu0 0.0
    %835 = vmatprep.subr.mxu0 0.0
    %836 = vmatpush1.msra.mxu0 0.0
    %837 = vmatprep.subr.mxu0 0.0
    %838 = vmatpush1.msra.mxu0 0.0
    %839 = vmatprep.mubr.f32.mxu0 0.0
    %840 = vmatmul.mubr.f32.gmra.mrb[0].mxu0 %v703
    %v841 = vpop.f32.mrb[0].mxu0
    %v842 = vadd.f32 %v699, %v841
    %v843 = vpop.f32.mrb[0].mxu0
    %844 = vdwg.mxu0
    %845 = vrot.lane.b32.xlu0 %v542, 127
    %v846 = vpop.permute.xlu0 %845
    %847 = vrot.lane.b32.xlu0 %v543, 127
    %v848 = vpop.permute.xlu0 %847
    %v851 = vsel %vm349, %v846, 0.0
    %v852 = vsel %vm349, %v848, 0.0
    %s853 = scalar_lea.vmem [#allocation2], 40
    %v854 = vld [vmem:[%s853] sm:$0xff]
    %v856 = vsel %vm558, %v854, 0
    %858 = vmatprep.subr.mxu0 0.0
    %859 = vmatpush1.msra.mxu0 %v851
    %860 = vmatprep.subr.mxu0 0.0
    %861 = vmatpush1.msra.mxu0 0.0
    %862 = vmatprep.subr.mxu0 0.0
    %863 = vmatpush1.msra.mxu0 0.0
    %864 = vmatprep.subr.mxu0 0.0
    %865 = vmatpush1.msra.mxu0 0.0
    %866 = vmatprep.subr.mxu0 0.0
    %867 = vmatpush1.msra.mxu0 0.0
    %868 = vmatprep.subr.mxu0 0.0
    %869 = vmatpush1.msra.mxu0 0.0
    %870 = vmatprep.subr.mxu0 0.0
    %871 = vmatpush1.msra.mxu0 0.0
    %872 = vmatprep.subr.mxu0 0.0
    %873 = vmatpush1.msra.mxu0 0.0
    %874 = vmatprep.subr.mxu0 0.0
    %875 = vmatpush1.msra.mxu0 0.0
    %876 = vmatprep.subr.mxu0 0.0
    %877 = vmatpush1.msra.mxu0 0.0
    %878 = vmatprep.subr.mxu0 0.0
    %879 = vmatpush1.msra.mxu0 0.0
    %880 = vmatprep.subr.mxu0 0.0
    %881 = vmatpush1.msra.mxu0 0.0
    %882 = vmatprep.subr.mxu0 0.0
    %883 = vmatpush1.msra.mxu0 0.0
    %884 = vmatprep.subr.mxu0 0.0
    %885 = vmatpush1.msra.mxu0 0.0
    %886 = vmatprep.subr.mxu0 0.0
    %887 = vmatpush1.msra.mxu0 0.0
    %888 = vmatprep.subr.mxu0 0.0
    %889 = vmatpush1.msra.mxu0 0.0
    %890 = vmatprep.subr.mxu0 0.0
    %891 = vmatpush1.msra.mxu0 0.0
    %892 = vmatprep.subr.mxu0 0.0
    %893 = vmatpush1.msra.mxu0 0.0
    %894 = vmatprep.subr.mxu0 0.0
    %895 = vmatpush1.msra.mxu0 0.0
    %896 = vmatprep.subr.mxu0 0.0
    %897 = vmatpush1.msra.mxu0 0.0
    %898 = vmatprep.subr.mxu0 0.0
    %899 = vmatpush1.msra.mxu0 0.0
    %900 = vmatprep.subr.mxu0 0.0
    %901 = vmatpush1.msra.mxu0 0.0
    %902 = vmatprep.subr.mxu0 0.0
    %903 = vmatpush1.msra.mxu0 0.0
    %904 = vmatprep.subr.mxu0 0.0
    %905 = vmatpush1.msra.mxu0 0.0
    %906 = vmatprep.subr.mxu0 0.0
    %907 = vmatpush1.msra.mxu0 0.0
    %908 = vmatprep.subr.mxu0 0.0
    %909 = vmatpush1.msra.mxu0 0.0
    %910 = vmatprep.subr.mxu0 0.0
    %911 = vmatpush1.msra.mxu0 0.0
    %912 = vmatprep.subr.mxu0 0.0
    %913 = vmatpush1.msra.mxu0 0.0
    %914 = vmatprep.subr.mxu0 0.0
    %915 = vmatpush1.msra.mxu0 0.0
    %916 = vmatprep.subr.mxu0 0.0
    %917 = vmatpush1.msra.mxu0 0.0
    %918 = vmatprep.subr.mxu0 0.0
    %919 = vmatpush1.msra.mxu0 0.0
    %920 = vmatprep.subr.mxu0 0.0
    %921 = vmatpush1.msra.mxu0 0.0
    %922 = vmatprep.mubr.f32.mxu0 0.0
    %923 = vmatmul.mubr.f32.gmra.mrb[0].mxu0 %v856
    %v924 = vpop.f32.mrb[0].mxu0
    %v925 = vadd.f32 0.0, %v924
    %v926 = vpop.f32.mrb[0].mxu0
    %927 = vdwg.mxu0
    %928 = vmatprep.subr.mxu0 0.0
    %929 = vmatpush1.msra.mxu0 %v852
    %930 = vmatprep.subr.mxu0 0.0
    %931 = vmatpush1.msra.mxu0 0.0
    %932 = vmatprep.subr.mxu0 0.0
    %933 = vmatpush1.msra.mxu0 0.0
    %934 = vmatprep.subr.mxu0 0.0
    %935 = vmatpush1.msra.mxu0 0.0
    %936 = vmatprep.subr.mxu0 0.0
    %937 = vmatpush1.msra.mxu0 0.0
    %938 = vmatprep.subr.mxu0 0.0
    %939 = vmatpush1.msra.mxu0 0.0
    %940 = vmatprep.subr.mxu0 0.0
    %941 = vmatpush1.msra.mxu0 0.0
    %942 = vmatprep.subr.mxu0 0.0
    %943 = vmatpush1.msra.mxu0 0.0
    %944 = vmatprep.subr.mxu0 0.0
    %945 = vmatpush1.msra.mxu0 0.0
    %946 = vmatprep.subr.mxu0 0.0
    %947 = vmatpush1.msra.mxu0 0.0
    %948 = vmatprep.subr.mxu0 0.0
    %949 = vmatpush1.msra.mxu0 0.0
    %950 = vmatprep.subr.mxu0 0.0
    %951 = vmatpush1.msra.mxu0 0.0
    %952 = vmatprep.subr.mxu0 0.0
    %953 = vmatpush1.msra.mxu0 0.0
    %954 = vmatprep.subr.mxu0 0.0
    %955 = vmatpush1.msra.mxu0 0.0
    %956 = vmatprep.subr.mxu0 0.0
    %957 = vmatpush1.msra.mxu0 0.0
    %958 = vmatprep.subr.mxu0 0.0
    %959 = vmatpush1.msra.mxu0 0.0
    %960 = vmatprep.subr.mxu0 0.0
    %961 = vmatpush1.msra.mxu0 0.0
    %962 = vmatprep.subr.mxu0 0.0
    %963 = vmatpush1.msra.mxu0 0.0
    %964 = vmatprep.subr.mxu0 0.0
    %965 = vmatpush1.msra.mxu0 0.0
    %966 = vmatprep.subr.mxu0 0.0
    %967 = vmatpush1.msra.mxu0 0.0
    %968 = vmatprep.subr.mxu0 0.0
    %969 = vmatpush1.msra.mxu0 0.0
    %970 = vmatprep.subr.mxu0 0.0
    %971 = vmatpush1.msra.mxu0 0.0
    %972 = vmatprep.subr.mxu0 0.0
    %973 = vmatpush1.msra.mxu0 0.0
    %974 = vmatprep.subr.mxu0 0.0
    %975 = vmatpush1.msra.mxu0 0.0
    %976 = vmatprep.subr.mxu0 0.0
    %977 = vmatpush1.msra.mxu0 0.0
    %978 = vmatprep.subr.mxu0 0.0
    %979 = vmatpush1.msra.mxu0 0.0
    %980 = vmatprep.subr.mxu0 0.0
    %981 = vmatpush1.msra.mxu0 0.0
    %982 = vmatprep.subr.mxu0 0.0
    %983 = vmatpush1.msra.mxu0 0.0
    %984 = vmatprep.subr.mxu0 0.0
    %985 = vmatpush1.msra.mxu0 0.0
    %986 = vmatprep.subr.mxu0 0.0
    %987 = vmatpush1.msra.mxu0 0.0
    %988 = vmatprep.subr.mxu0 0.0
    %989 = vmatpush1.msra.mxu0 0.0
    %990 = vmatprep.subr.mxu0 0.0
    %991 = vmatpush1.msra.mxu0 0.0
    %992 = vmatprep.mubr.f32.mxu0 0.0
    %993 = vmatmul.mubr.f32.gmra.mrb[0].mxu0 %v856
    %v994 = vpop.f32.mrb[0].mxu0
    %v995 = vadd.f32 0.0, %v994
    %v996 = vpop.f32.mrb[0].mxu0
    %997 = vdwg.mxu0
    %v998 = vadd.f32 %v772, %v925
    %v999 = vadd.f32 %v842, %v995
    %v1000 = vsel %vm505, %v998, 0.0
    %v1001 = vsel %vm505, %v999, 0.0
    %v1002 = vadd.f32 %v1000, %v1001
    %1003 = vadd.xlane.f32.xlu0 %v1002
    %v1004 = vpop.xlane.xlu0 %1003
    %v1005 = vmul.f32 %v1004, %v511
    %v1006 = vsub.f32 %v998, %v1005
    %v1007 = vsub.f32 %v999, %v1005
    %v1008 = vmul.f32 %v1006, %v1006
    %v1009 = vmul.f32 %v1007, %v1007
    %v1010 = vsel %vm505, %v1008, 0.0
    %v1011 = vsel %vm505, %v1009, 0.0
    %v1012 = vadd.f32 %v1010, %v1011
    %1013 = vadd.xlane.f32.xlu0 %v1012
    %v1014 = vpop.xlane.xlu0 %1013
    %v1015 = vmul.f32 %v1014, %v511
    %s1016 = scalar_lea.vmem %s2, 16
    %v1017 = vld [vmem:[%s1016] sm:$0xff]
    %v1018 = vld [vmem:[%s1016 + $0x8] sm:$0xff]
    %v1019 = vadd.f32 %v1015, 1e-05
    %v1020 = vrsqrt.pop %v1019
    %v1021 = vmul.f32 %v1017, %v1020
    %1023 = vset.pattern.permute.xlu0 0
    %1024 = vperm.xlu0 %1023, %v1021
    %v1025 = vpop.permute.xlu0 %1024
    %v1027 = vmul.f32 %v1006, %v1025
    %v1028 = vmul.f32 %v1007, %v1025
    %1030 = vset.pattern.permute.xlu0 0
    %1031 = vperm.xlu0 %1030, %v1018
    %v1032 = vpop.permute.xlu0 %1031
    %v1034 = vadd.f32 %v1027, %v1032
    %v1035 = vadd.f32 %v1028, %v1032
    %v1036 = vmax.f32 %v1034, 0.0
    %v1037 = vmax.f32 %v1035, 0.0
    %1040 = vrot.lane.b32.xlu0 %v1036, 1
    %v1041 = vpop.permute.xlu0 %1040
    %1042 = vrot.lane.b32.xlu0 %v1037, 1
    %v1043 = vpop.permute.xlu0 %1042
    %v1046 = vsel %vm39, 0.0, %v1041
    %v1047 = vsel %vm39, 0.0, %v1043
    %s1048 = scalar_lea.vmem [#allocation2], 48
    %v1049 = vld [vmem:[%s1048] sm:$0xff]
    %s1050 = scalar_lea.vmem [#allocation2], 56
    %v1051 = vld [vmem:[%s1050] sm:$0xff]
    %v1053 = vsel %vm558, %v1051, 0
    %1055 = vmatprep.subr.mxu0 0.0
    %1056 = vmatpush1.msra.mxu0 %v1036
    %1057 = vmatprep.subr.mxu0 0.0
    %1058 = vmatpush1.msra.mxu0 0.0
    %1059 = vmatprep.subr.mxu0 0.0
    %1060 = vmatpush1.msra.mxu0 0.0
    %1061 = vmatprep.subr.mxu0 0.0
    %1062 = vmatpush1.msra.mxu0 0.0
    %1063 = vmatprep.subr.mxu0 0.0
    %1064 = vmatpush1.msra.mxu0 0.0
    %1065 = vmatprep.subr.mxu0 0.0
    %1066 = vmatpush1.msra.mxu0 0.0
    %1067 = vmatprep.subr.mxu0 0.0
    %1068 = vmatpush1.msra.mxu0 0.0
    %1069 = vmatprep.subr.mxu0 0.0
    %1070 = vmatpush1.msra.mxu0 0.0
    %1071 = vmatprep.subr.mxu0 0.0
    %1072 = vmatpush1.msra.mxu0 0.0
    %1073 = vmatprep.subr.mxu0 0.0
    %1074 = vmatpush1.msra.mxu0 0.0
    %1075 = vmatprep.subr.mxu0 0.0
    %1076 = vmatpush1.msra.mxu0 0.0
    %1077 = vmatprep.subr.mxu0 0.0
    %1078 = vmatpush1.msra.mxu0 0.0
    %1079 = vmatprep.subr.mxu0 0.0
    %1080 = vmatpush1.msra.mxu0 0.0
    %1081 = vmatprep.subr.mxu0 0.0
    %1082 = vmatpush1.msra.mxu0 0.0
    %1083 = vmatprep.subr.mxu0 0.0
    %1084 = vmatpush1.msra.mxu0 0.0
    %1085 = vmatprep.subr.mxu0 0.0
    %1086 = vmatpush1.msra.mxu0 0.0
    %1087 = vmatprep.subr.mxu0 0.0
    %1088 = vmatpush1.msra.mxu0 0.0
    %1089 = vmatprep.subr.mxu0 0.0
    %1090 = vmatpush1.msra.mxu0 0.0
    %1091 = vmatprep.subr.mxu0 0.0
    %1092 = vmatpush1.msra.mxu0 0.0
    %1093 = vmatprep.subr.mxu0 0.0
    %1094 = vmatpush1.msra.mxu0 0.0
    %1095 = vmatprep.subr.mxu0 0.0
    %1096 = vmatpush1.msra.mxu0 0.0
    %1097 = vmatprep.subr.mxu0 0.0
    %1098 = vmatpush1.msra.mxu0 0.0
    %1099 = vmatprep.subr.mxu0 0.0
    %1100 = vmatpush1.msra.mxu0 0.0
    %1101 = vmatprep.subr.mxu0 0.0
    %1102 = vmatpush1.msra.mxu0 0.0
    %1103 = vmatprep.subr.mxu0 0.0
    %1104 = vmatpush1.msra.mxu0 0.0
    %1105 = vmatprep.subr.mxu0 0.0
    %1106 = vmatpush1.msra.mxu0 0.0
    %1107 = vmatprep.subr.mxu0 0.0
    %1108 = vmatpush1.msra.mxu0 0.0
    %1109 = vmatprep.subr.mxu0 0.0
    %1110 = vmatpush1.msra.mxu0 0.0
    %1111 = vmatprep.subr.mxu0 0.0
    %1112 = vmatpush1.msra.mxu0 0.0
    %1113 = vmatprep.subr.mxu0 0.0
    %1114 = vmatpush1.msra.mxu0 0.0
    %1115 = vmatprep.subr.mxu0 0.0
    %1116 = vmatpush1.msra.mxu0 0.0
    %1117 = vmatprep.subr.mxu0 0.0
    %1118 = vmatpush1.msra.mxu0 0.0
    %1119 = vmatprep.mubr.f32.mxu0 0.0
    %1120 = vmatmul.mubr.f32.gmra.mrb[0].mxu0 %v1053
    %v1121 = vpop.f32.mrb[0].mxu0
    %v1122 = vadd.f32 0.0, %v1121
    %v1123 = vpop.f32.mrb[0].mxu0
    %1124 = vdwg.mxu0
    %1125 = vmatprep.subr.mxu0 0.0
    %1126 = vmatpush1.msra.mxu0 %v1037
    %1127 = vmatprep.subr.mxu0 0.0
    %1128 = vmatpush1.msra.mxu0 0.0
    %1129 = vmatprep.subr.mxu0 0.0
    %1130 = vmatpush1.msra.mxu0 0.0
    %1131 = vmatprep.subr.mxu0 0.0
    %1132 = vmatpush1.msra.mxu0 0.0
    %1133 = vmatprep.subr.mxu0 0.0
    %1134 = vmatpush1.msra.mxu0 0.0
    %1135 = vmatprep.subr.mxu0 0.0
    %1136 = vmatpush1.msra.mxu0 0.0
    %1137 = vmatprep.subr.mxu0 0.0
    %1138 = vmatpush1.msra.mxu0 0.0
    %1139 = vmatprep.subr.mxu0 0.0
    %1140 = vmatpush1.msra.mxu0 0.0
    %1141 = vmatprep.subr.mxu0 0.0
    %1142 = vmatpush1.msra.mxu0 0.0
    %1143 = vmatprep.subr.mxu0 0.0
    %1144 = vmatpush1.msra.mxu0 0.0
    %1145 = vmatprep.subr.mxu0 0.0
    %1146 = vmatpush1.msra.mxu0 0.0
    %1147 = vmatprep.subr.mxu0 0.0
    %1148 = vmatpush1.msra.mxu0 0.0
    %1149 = vmatprep.subr.mxu0 0.0
    %1150 = vmatpush1.msra.mxu0 0.0
    %1151 = vmatprep.subr.mxu0 0.0
    %1152 = vmatpush1.msra.mxu0 0.0
    %1153 = vmatprep.subr.mxu0 0.0
    %1154 = vmatpush1.msra.mxu0 0.0
    %1155 = vmatprep.subr.mxu0 0.0
    %1156 = vmatpush1.msra.mxu0 0.0
    %1157 = vmatprep.subr.mxu0 0.0
    %1158 = vmatpush1.msra.mxu0 0.0
    %1159 = vmatprep.subr.mxu0 0.0
    %1160 = vmatpush1.msra.mxu0 0.0
    %1161 = vmatprep.subr.mxu0 0.0
    %1162 = vmatpush1.msra.mxu0 0.0
    %1163 = vmatprep.subr.mxu0 0.0
    %1164 = vmatpush1.msra.mxu0 0.0
    %1165 = vmatprep.subr.mxu0 0.0
    %1166 = vmatpush1.msra.mxu0 0.0
    %1167 = vmatprep.subr.mxu0 0.0
    %1168 = vmatpush1.msra.mxu0 0.0
    %1169 = vmatprep.subr.mxu0 0.0
    %1170 = vmatpush1.msra.mxu0 0.0
    %1171 = vmatprep.subr.mxu0 0.0
    %1172 = vmatpush1.msra.mxu0 0.0
    %1173 = vmatprep.subr.mxu0 0.0
    %1174 = vmatpush1.msra.mxu0 0.0
    %1175 = vmatprep.subr.mxu0 0.0
    %1176 = vmatpush1.msra.mxu0 0.0
    %1177 = vmatprep.subr.mxu0 0.0
    %1178 = vmatpush1.msra.mxu0 0.0
    %1179 = vmatprep.subr.mxu0 0.0
    %1180 = vmatpush1.msra.mxu0 0.0
    %1181 = vmatprep.subr.mxu0 0.0
    %1182 = vmatpush1.msra.mxu0 0.0
    %1183 = vmatprep.subr.mxu0 0.0
    %1184 = vmatpush1.msra.mxu0 0.0
    %1185 = vmatprep.subr.mxu0 0.0
    %1186 = vmatpush1.msra.mxu0 0.0
    %1187 = vmatprep.subr.mxu0 0.0
    %1188 = vmatpush1.msra.mxu0 0.0
    %1189 = vmatprep.mubr.f32.mxu0 0.0
    %1190 = vmatmul.mubr.f32.gmra.mrb[0].mxu0 %v1053
    %v1191 = vpop.f32.mrb[0].mxu0
    %v1192 = vadd.f32 0.0, %v1191
    %v1193 = vpop.f32.mrb[0].mxu0
    %1194 = vdwg.mxu0
    %v1196 = vsel %vm558, %v1049, 0
    %1198 = vmatprep.subr.mxu0 0.0
    %1199 = vmatpush1.msra.mxu0 %v1046
    %1200 = vmatprep.subr.mxu0 0.0
    %1201 = vmatpush1.msra.mxu0 0.0
    %1202 = vmatprep.subr.mxu0 0.0
    %1203 = vmatpush1.msra.mxu0 0.0
    %1204 = vmatprep.subr.mxu0 0.0
    %1205 = vmatpush1.msra.mxu0 0.0
    %1206 = vmatprep.subr.mxu0 0.0
    %1207 = vmatpush1.msra.mxu0 0.0
    %1208 = vmatprep.subr.mxu0 0.0
    %1209 = vmatpush1.msra.mxu0 0.0
    %1210 = vmatprep.subr.mxu0 0.0
    %1211 = vmatpush1.msra.mxu0 0.0
    %1212 = vmatprep.subr.mxu0 0.0
    %1213 = vmatpush1.msra.mxu0 0.0
    %1214 = vmatprep.subr.mxu0 0.0
    %1215 = vmatpush1.msra.mxu0 0.0
    %1216 = vmatprep.subr.mxu0 0.0
    %1217 = vmatpush1.msra.mxu0 0.0
    %1218 = vmatprep.subr.mxu0 0.0
    %1219 = vmatpush1.msra.mxu0 0.0
    %1220 = vmatprep.subr.mxu0 0.0
    %1221 = vmatpush1.msra.mxu0 0.0
    %1222 = vmatprep.subr.mxu0 0.0
    %1223 = vmatpush1.msra.mxu0 0.0
    %1224 = vmatprep.subr.mxu0 0.0
    %1225 = vmatpush1.msra.mxu0 0.0
    %1226 = vmatprep.subr.mxu0 0.0
    %1227 = vmatpush1.msra.mxu0 0.0
    %1228 = vmatprep.subr.mxu0 0.0
    %1229 = vmatpush1.msra.mxu0 0.0
    %1230 = vmatprep.subr.mxu0 0.0
    %1231 = vmatpush1.msra.mxu0 0.0
    %1232 = vmatprep.subr.mxu0 0.0
    %1233 = vmatpush1.msra.mxu0 0.0
    %1234 = vmatprep.subr.mxu0 0.0
    %1235 = vmatpush1.msra.mxu0 0.0
    %1236 = vmatprep.subr.mxu0 0.0
    %1237 = vmatpush1.msra.mxu0 0.0
    %1238 = vmatprep.subr.mxu0 0.0
    %1239 = vmatpush1.msra.mxu0 0.0
    %1240 = vmatprep.subr.mxu0 0.0
    %1241 = vmatpush1.msra.mxu0 0.0
    %1242 = vmatprep.subr.mxu0 0.0
    %1243 = vmatpush1.msra.mxu0 0.0
    %1244 = vmatprep.subr.mxu0 0.0
    %1245 = vmatpush1.msra.mxu0 0.0
    %1246 = vmatprep.subr.mxu0 0.0
    %1247 = vmatpush1.msra.mxu0 0.0
    %1248 = vmatprep.subr.mxu0 0.0
    %1249 = vmatpush1.msra.mxu0 0.0
    %1250 = vmatprep.subr.mxu0 0.0
    %1251 = vmatpush1.msra.mxu0 0.0
    %1252 = vmatprep.subr.mxu0 0.0
    %1253 = vmatpush1.msra.mxu0 0.0
    %1254 = vmatprep.subr.mxu0 0.0
    %1255 = vmatpush1.msra.mxu0 0.0
    %1256 = vmatprep.subr.mxu0 0.0
    %1257 = vmatpush1.msra.mxu0 0.0
    %1258 = vmatprep.subr.mxu0 0.0
    %1259 = vmatpush1.msra.mxu0 0.0
    %1260 = vmatprep.subr.mxu0 0.0
    %1261 = vmatpush1.msra.mxu0 0.0
    %1262 = vmatprep.mubr.f32.mxu0 0.0
    %1263 = vmatmul.mubr.f32.gmra.mrb[0].mxu0 %v1196
    %v1264 = vpop.f32.mrb[0].mxu0
    %v1265 = vadd.f32 %v1122, %v1264
    %v1266 = vpop.f32.mrb[0].mxu0
    %1267 = vdwg.mxu0
    %1268 = vmatprep.subr.mxu0 0.0
    %1269 = vmatpush1.msra.mxu0 %v1047
    %1270 = vmatprep.subr.mxu0 0.0
    %1271 = vmatpush1.msra.mxu0 0.0
    %1272 = vmatprep.subr.mxu0 0.0
    %1273 = vmatpush1.msra.mxu0 0.0
    %1274 = vmatprep.subr.mxu0 0.0
    %1275 = vmatpush1.msra.mxu0 0.0
    %1276 = vmatprep.subr.mxu0 0.0
    %1277 = vmatpush1.msra.mxu0 0.0
    %1278 = vmatprep.subr.mxu0 0.0
    %1279 = vmatpush1.msra.mxu0 0.0
    %1280 = vmatprep.subr.mxu0 0.0
    %1281 = vmatpush1.msra.mxu0 0.0
    %1282 = vmatprep.subr.mxu0 0.0
    %1283 = vmatpush1.msra.mxu0 0.0
    %1284 = vmatprep.subr.mxu0 0.0
    %1285 = vmatpush1.msra.mxu0 0.0
    %1286 = vmatprep.subr.mxu0 0.0
    %1287 = vmatpush1.msra.mxu0 0.0
    %1288 = vmatprep.subr.mxu0 0.0
    %1289 = vmatpush1.msra.mxu0 0.0
    %1290 = vmatprep.subr.mxu0 0.0
    %1291 = vmatpush1.msra.mxu0 0.0
    %1292 = vmatprep.subr.mxu0 0.0
    %1293 = vmatpush1.msra.mxu0 0.0
    %1294 = vmatprep.subr.mxu0 0.0
    %1295 = vmatpush1.msra.mxu0 0.0
    %1296 = vmatprep.subr.mxu0 0.0
    %1297 = vmatpush1.msra.mxu0 0.0
    %1298 = vmatprep.subr.mxu0 0.0
    %1299 = vmatpush1.msra.mxu0 0.0
    %1300 = vmatprep.subr.mxu0 0.0
    %1301 = vmatpush1.msra.mxu0 0.0
    %1302 = vmatprep.subr.mxu0 0.0
    %1303 = vmatpush1.msra.mxu0 0.0
    %1304 = vmatprep.subr.mxu0 0.0
    %1305 = vmatpush1.msra.mxu0 0.0
    %1306 = vmatprep.subr.mxu0 0.0
    %1307 = vmatpush1.msra.mxu0 0.0
    %1308 = vmatprep.subr.mxu0 0.0
    %1309 = vmatpush1.msra.mxu0 0.0
    %1310 = vmatprep.subr.mxu0 0.0
    %1311 = vmatpush1.msra.mxu0 0.0
    %1312 = vmatprep.subr.mxu0 0.0
    %1313 = vmatpush1.msra.mxu0 0.0
    %1314 = vmatprep.subr.mxu0 0.0
    %1315 = vmatpush1.msra.mxu0 0.0
    %1316 = vmatprep.subr.mxu0 0.0
    %1317 = vmatpush1.msra.mxu0 0.0
    %1318 = vmatprep.subr.mxu0 0.0
    %1319 = vmatpush1.msra.mxu0 0.0
    %1320 = vmatprep.subr.mxu0 0.0
    %1321 = vmatpush1.msra.mxu0 0.0
    %1322 = vmatprep.subr.mxu0 0.0
    %1323 = vmatpush1.msra.mxu0 0.0
    %1324 = vmatprep.subr.mxu0 0.0
    %1325 = vmatpush1.msra.mxu0 0.0
    %1326 = vmatprep.subr.mxu0 0.0
    %1327 = vmatpush1.msra.mxu0 0.0
    %1328 = vmatprep.subr.mxu0 0.0
    %1329 = vmatpush1.msra.mxu0 0.0
    %1330 = vmatprep.subr.mxu0 0.0
    %1331 = vmatpush1.msra.mxu0 0.0
    %1332 = vmatprep.mubr.f32.mxu0 0.0
    %1333 = vmatmul.mubr.f32.gmra.mrb[0].mxu0 %v1196
    %v1334 = vpop.f32.mrb[0].mxu0
    %v1335 = vadd.f32 %v1192, %v1334
    %v1336 = vpop.f32.mrb[0].mxu0
    %1337 = vdwg.mxu0
    %1338 = vrot.lane.b32.xlu0 %v1036, 127
    %v1339 = vpop.permute.xlu0 %1338
    %1340 = vrot.lane.b32.xlu0 %v1037, 127
    %v1341 = vpop.permute.xlu0 %1340
    %v1344 = vsel %vm349, %v1339, 0.0
    %v1345 = vsel %vm349, %v1341, 0.0
    %s1346 = scalar_lea.vmem [#allocation2], 64
    %v1347 = vld [vmem:[%s1346] sm:$0xff]
    %v1349 = vsel %vm558, %v1347, 0
    %1351 = vmatprep.subr.mxu0 0.0
    %1352 = vmatpush1.msra.mxu0 %v1344
    %1353 = vmatprep.subr.mxu0 0.0
    %1354 = vmatpush1.msra.mxu0 0.0
    %1355 = vmatprep.subr.mxu0 0.0
    %1356 = vmatpush1.msra.mxu0 0.0
    %1357 = vmatprep.subr.mxu0 0.0
    %1358 = vmatpush1.msra.mxu0 0.0
    %1359 = vmatprep.subr.mxu0 0.0
    %1360 = vmatpush1.msra.mxu0 0.0
    %1361 = vmatprep.subr.mxu0 0.0
    %1362 = vmatpush1.msra.mxu0 0.0
    %1363 = vmatprep.subr.mxu0 0.0
    %1364 = vmatpush1.msra.mxu0 0.0
    %1365 = vmatprep.subr.mxu0 0.0
    %1366 = vmatpush1.msra.mxu0 0.0
    %1367 = vmatprep.subr.mxu0 0.0
    %1368 = vmatpush1.msra.mxu0 0.0
    %1369 = vmatprep.subr.mxu0 0.0
    %1370 = vmatpush1.msra.mxu0 0.0
    %1371 = vmatprep.subr.mxu0 0.0
    %1372 = vmatpush1.msra.mxu0 0.0
    %1373 = vmatprep.subr.mxu0 0.0
    %1374 = vmatpush1.msra.mxu0 0.0
    %1375 = vmatprep.subr.mxu0 0.0
    %1376 = vmatpush1.msra.mxu0 0.0
    %1377 = vmatprep.subr.mxu0 0.0
    %1378 = vmatpush1.msra.mxu0 0.0
    %1379 = vmatprep.subr.mxu0 0.0
    %1380 = vmatpush1.msra.mxu0 0.0
    %1381 = vmatprep.subr.mxu0 0.0
    %1382 = vmatpush1.msra.mxu0 0.0
    %1383 = vmatprep.subr.mxu0 0.0
    %1384 = vmatpush1.msra.mxu0 0.0
    %1385 = vmatprep.subr.mxu0 0.0
    %1386 = vmatpush1.msra.mxu0 0.0
    %1387 = vmatprep.subr.mxu0 0.0
    %1388 = vmatpush1.msra.mxu0 0.0
    %1389 = vmatprep.subr.mxu0 0.0
    %1390 = vmatpush1.msra.mxu0 0.0
    %1391 = vmatprep.subr.mxu0 0.0
    %1392 = vmatpush1.msra.mxu0 0.0
    %1393 = vmatprep.subr.mxu0 0.0
    %1394 = vmatpush1.msra.mxu0 0.0
    %1395 = vmatprep.subr.mxu0 0.0
    %1396 = vmatpush1.msra.mxu0 0.0
    %1397 = vmatprep.subr.mxu0 0.0
    %1398 = vmatpush1.msra.mxu0 0.0
    %1399 = vmatprep.subr.mxu0 0.0
    %1400 = vmatpush1.msra.mxu0 0.0
    %1401 = vmatprep.subr.mxu0 0.0
    %1402 = vmatpush1.msra.mxu0 0.0
    %1403 = vmatprep.subr.mxu0 0.0
    %1404 = vmatpush1.msra.mxu0 0.0
    %1405 = vmatprep.subr.mxu0 0.0
    %1406 = vmatpush1.msra.mxu0 0.0
    %1407 = vmatprep.subr.mxu0 0.0
    %1408 = vmatpush1.msra.mxu0 0.0
    %1409 = vmatprep.subr.mxu0 0.0
    %1410 = vmatpush1.msra.mxu0 0.0
    %1411 = vmatprep.subr.mxu0 0.0
    %1412 = vmatpush1.msra.mxu0 0.0
    %1413 = vmatprep.subr.mxu0 0.0
    %1414 = vmatpush1.msra.mxu0 0.0
    %1415 = vmatprep.mubr.f32.mxu0 0.0
    %1416 = vmatmul.mubr.f32.gmra.mrb[0].mxu0 %v1349
    %v1417 = vpop.f32.mrb[0].mxu0
    %v1418 = vadd.f32 0.0, %v1417
    %v1419 = vpop.f32.mrb[0].mxu0
    %1420 = vdwg.mxu0
    %1421 = vmatprep.subr.mxu0 0.0
    %1422 = vmatpush1.msra.mxu0 %v1345
    %1423 = vmatprep.subr.mxu0 0.0
    %1424 = vmatpush1.msra.mxu0 0.0
    %1425 = vmatprep.subr.mxu0 0.0
    %1426 = vmatpush1.msra.mxu0 0.0
    %1427 = vmatprep.subr.mxu0 0.0
    %1428 = vmatpush1.msra.mxu0 0.0
    %1429 = vmatprep.subr.mxu0 0.0
    %1430 = vmatpush1.msra.mxu0 0.0
    %1431 = vmatprep.subr.mxu0 0.0
    %1432 = vmatpush1.msra.mxu0 0.0
    %1433 = vmatprep.subr.mxu0 0.0
    %1434 = vmatpush1.msra.mxu0 0.0
    %1435 = vmatprep.subr.mxu0 0.0
    %1436 = vmatpush1.msra.mxu0 0.0
    %1437 = vmatprep.subr.mxu0 0.0
    %1438 = vmatpush1.msra.mxu0 0.0
    %1439 = vmatprep.subr.mxu0 0.0
    %1440 = vmatpush1.msra.mxu0 0.0
    %1441 = vmatprep.subr.mxu0 0.0
    %1442 = vmatpush1.msra.mxu0 0.0
    %1443 = vmatprep.subr.mxu0 0.0
    %1444 = vmatpush1.msra.mxu0 0.0
    %1445 = vmatprep.subr.mxu0 0.0
    %1446 = vmatpush1.msra.mxu0 0.0
    %1447 = vmatprep.subr.mxu0 0.0
    %1448 = vmatpush1.msra.mxu0 0.0
    %1449 = vmatprep.subr.mxu0 0.0
    %1450 = vmatpush1.msra.mxu0 0.0
    %1451 = vmatprep.subr.mxu0 0.0
    %1452 = vmatpush1.msra.mxu0 0.0
    %1453 = vmatprep.subr.mxu0 0.0
    %1454 = vmatpush1.msra.mxu0 0.0
    %1455 = vmatprep.subr.mxu0 0.0
    %1456 = vmatpush1.msra.mxu0 0.0
    %1457 = vmatprep.subr.mxu0 0.0
    %1458 = vmatpush1.msra.mxu0 0.0
    %1459 = vmatprep.subr.mxu0 0.0
    %1460 = vmatpush1.msra.mxu0 0.0
    %1461 = vmatprep.subr.mxu0 0.0
    %1462 = vmatpush1.msra.mxu0 0.0
    %1463 = vmatprep.subr.mxu0 0.0
    %1464 = vmatpush1.msra.mxu0 0.0
    %1465 = vmatprep.subr.mxu0 0.0
    %1466 = vmatpush1.msra.mxu0 0.0
    %1467 = vmatprep.subr.mxu0 0.0
    %1468 = vmatpush1.msra.mxu0 0.0
    %1469 = vmatprep.subr.mxu0 0.0
    %1470 = vmatpush1.msra.mxu0 0.0
    %1471 = vmatprep.subr.mxu0 0.0
    %1472 = vmatpush1.msra.mxu0 0.0
    %1473 = vmatprep.subr.mxu0 0.0
    %1474 = vmatpush1.msra.mxu0 0.0
    %1475 = vmatprep.subr.mxu0 0.0
    %1476 = vmatpush1.msra.mxu0 0.0
    %1477 = vmatprep.subr.mxu0 0.0
    %1478 = vmatpush1.msra.mxu0 0.0
    %1479 = vmatprep.subr.mxu0 0.0
    %1480 = vmatpush1.msra.mxu0 0.0
    %1481 = vmatprep.subr.mxu0 0.0
    %1482 = vmatpush1.msra.mxu0 0.0
    %1483 = vmatprep.subr.mxu0 0.0
    %1484 = vmatpush1.msra.mxu0 0.0
    %1485 = vmatprep.mubr.f32.mxu0 0.0
    %1486 = vmatmul.mubr.f32.gmra.mrb[0].mxu0 %v1349
    %v1487 = vpop.f32.mrb[0].mxu0
    %v1488 = vadd.f32 0.0, %v1487
    %v1489 = vpop.f32.mrb[0].mxu0
    %1490 = vdwg.mxu0
    %v1491 = vadd.f32 %v1265, %v1418
    %v1492 = vadd.f32 %v1335, %v1488
    %v1493 = vsel %vm505, %v1491, 0.0
    %v1494 = vsel %vm505, %v1492, 0.0
    %v1495 = vadd.f32 %v1493, %v1494
    %1496 = vadd.xlane.f32.xlu0 %v1495
    %v1497 = vpop.xlane.xlu0 %1496
    %v1498 = vmul.f32 %v1497, %v511
    %v1499 = vsub.f32 %v1491, %v1498
    %v1500 = vsub.f32 %v1492, %v1498
    %v1501 = vmul.f32 %v1499, %v1499
    %v1502 = vmul.f32 %v1500, %v1500
    %v1503 = vsel %vm505, %v1501, 0.0
    %v1504 = vsel %vm505, %v1502, 0.0
    %v1505 = vadd.f32 %v1503, %v1504
    %1506 = vadd.xlane.f32.xlu0 %v1505
    %v1507 = vpop.xlane.xlu0 %1506
    %v1508 = vmul.f32 %v1507, %v511
    %s1509 = scalar_lea.vmem %s2, 32
    %v1510 = vld [vmem:[%s1509] sm:$0xff]
    %v1511 = vld [vmem:[%s1509 + $0x8] sm:$0xff]
    %v1512 = vadd.f32 %v1508, 1e-05
    %v1513 = vrsqrt.pop %v1512
    %v1514 = vmul.f32 %v1510, %v1513
    %1516 = vset.pattern.permute.xlu0 0
    %1517 = vperm.xlu0 %1516, %v1514
    %v1518 = vpop.permute.xlu0 %1517
    %v1520 = vmul.f32 %v1499, %v1518
    %v1521 = vmul.f32 %v1500, %v1518
    %1523 = vset.pattern.permute.xlu0 0
    %1524 = vperm.xlu0 %1523, %v1511
    %v1525 = vpop.permute.xlu0 %1524
    %v1527 = vadd.f32 %v1520, %v1525
    %v1528 = vadd.f32 %v1521, %v1525
    %v1529 = vmax.f32 %v1527, 0.0
    %v1530 = vmax.f32 %v1528, 0.0
    %1533 = vrot.lane.b32.xlu0 %v1529, 1
    %v1534 = vpop.permute.xlu0 %1533
    %1535 = vrot.lane.b32.xlu0 %v1530, 1
    %v1536 = vpop.permute.xlu0 %1535
    %v1539 = vsel %vm39, 0.0, %v1534
    %v1540 = vsel %vm39, 0.0, %v1536
    %s1541 = scalar_lea.vmem [#allocation2], 72
    %v1542 = vld [vmem:[%s1541] sm:$0xff]
    %s1543 = scalar_lea.vmem [#allocation2], 80
    %v1544 = vld [vmem:[%s1543] sm:$0xff]
    %v1546 = vsel %vm558, %v1544, 0
    %1548 = vmatprep.subr.mxu0 0.0
    %1549 = vmatpush1.msra.mxu0 %v1529
    %1550 = vmatprep.subr.mxu0 0.0
    %1551 = vmatpush1.msra.mxu0 0.0
    %1552 = vmatprep.subr.mxu0 0.0
    %1553 = vmatpush1.msra.mxu0 0.0
    %1554 = vmatprep.subr.mxu0 0.0
    %1555 = vmatpush1.msra.mxu0 0.0
    %1556 = vmatprep.subr.mxu0 0.0
    %1557 = vmatpush1.msra.mxu0 0.0
    %1558 = vmatprep.subr.mxu0 0.0
    %1559 = vmatpush1.msra.mxu0 0.0
    %1560 = vmatprep.subr.mxu0 0.0
    %1561 = vmatpush1.msra.mxu0 0.0
    %1562 = vmatprep.subr.mxu0 0.0
    %1563 = vmatpush1.msra.mxu0 0.0
    %1564 = vmatprep.subr.mxu0 0.0
    %1565 = vmatpush1.msra.mxu0 0.0
    %1566 = vmatprep.subr.mxu0 0.0
    %1567 = vmatpush1.msra.mxu0 0.0
    %1568 = vmatprep.subr.mxu0 0.0
    %1569 = vmatpush1.msra.mxu0 0.0
    %1570 = vmatprep.subr.mxu0 0.0
    %1571 = vmatpush1.msra.mxu0 0.0
    %1572 = vmatprep.subr.mxu0 0.0
    %1573 = vmatpush1.msra.mxu0 0.0
    %1574 = vmatprep.subr.mxu0 0.0
    %1575 = vmatpush1.msra.mxu0 0.0
    %1576 = vmatprep.subr.mxu0 0.0
    %1577 = vmatpush1.msra.mxu0 0.0
    %1578 = vmatprep.subr.mxu0 0.0
    %1579 = vmatpush1.msra.mxu0 0.0
    %1580 = vmatprep.subr.mxu0 0.0
    %1581 = vmatpush1.msra.mxu0 0.0
    %1582 = vmatprep.subr.mxu0 0.0
    %1583 = vmatpush1.msra.mxu0 0.0
    %1584 = vmatprep.subr.mxu0 0.0
    %1585 = vmatpush1.msra.mxu0 0.0
    %1586 = vmatprep.subr.mxu0 0.0
    %1587 = vmatpush1.msra.mxu0 0.0
    %1588 = vmatprep.subr.mxu0 0.0
    %1589 = vmatpush1.msra.mxu0 0.0
    %1590 = vmatprep.subr.mxu0 0.0
    %1591 = vmatpush1.msra.mxu0 0.0
    %1592 = vmatprep.subr.mxu0 0.0
    %1593 = vmatpush1.msra.mxu0 0.0
    %1594 = vmatprep.subr.mxu0 0.0
    %1595 = vmatpush1.msra.mxu0 0.0
    %1596 = vmatprep.subr.mxu0 0.0
    %1597 = vmatpush1.msra.mxu0 0.0
    %1598 = vmatprep.subr.mxu0 0.0
    %1599 = vmatpush1.msra.mxu0 0.0
    %1600 = vmatprep.subr.mxu0 0.0
    %1601 = vmatpush1.msra.mxu0 0.0
    %1602 = vmatprep.subr.mxu0 0.0
    %1603 = vmatpush1.msra.mxu0 0.0
    %1604 = vmatprep.subr.mxu0 0.0
    %1605 = vmatpush1.msra.mxu0 0.0
    %1606 = vmatprep.subr.mxu0 0.0
    %1607 = vmatpush1.msra.mxu0 0.0
    %1608 = vmatprep.subr.mxu0 0.0
    %1609 = vmatpush1.msra.mxu0 0.0
    %1610 = vmatprep.subr.mxu0 0.0
    %1611 = vmatpush1.msra.mxu0 0.0
    %1612 = vmatprep.mubr.f32.mxu0 0.0
    %1613 = vmatmul.mubr.f32.gmra.mrb[0].mxu0 %v1546
    %v1614 = vpop.f32.mrb[0].mxu0
    %v1615 = vadd.f32 0.0, %v1614
    %v1616 = vpop.f32.mrb[0].mxu0
    %1617 = vdwg.mxu0
    %1618 = vmatprep.subr.mxu0 0.0
    %1619 = vmatpush1.msra.mxu0 %v1530
    %1620 = vmatprep.subr.mxu0 0.0
    %1621 = vmatpush1.msra.mxu0 0.0
    %1622 = vmatprep.subr.mxu0 0.0
    %1623 = vmatpush1.msra.mxu0 0.0
    %1624 = vmatprep.subr.mxu0 0.0
    %1625 = vmatpush1.msra.mxu0 0.0
    %1626 = vmatprep.subr.mxu0 0.0
    %1627 = vmatpush1.msra.mxu0 0.0
    %1628 = vmatprep.subr.mxu0 0.0
    %1629 = vmatpush1.msra.mxu0 0.0
    %1630 = vmatprep.subr.mxu0 0.0
    %1631 = vmatpush1.msra.mxu0 0.0
    %1632 = vmatprep.subr.mxu0 0.0
    %1633 = vmatpush1.msra.mxu0 0.0
    %1634 = vmatprep.subr.mxu0 0.0
    %1635 = vmatpush1.msra.mxu0 0.0
    %1636 = vmatprep.subr.mxu0 0.0
    %1637 = vmatpush1.msra.mxu0 0.0
    %1638 = vmatprep.subr.mxu0 0.0
    %1639 = vmatpush1.msra.mxu0 0.0
    %1640 = vmatprep.subr.mxu0 0.0
    %1641 = vmatpush1.msra.mxu0 0.0
    %1642 = vmatprep.subr.mxu0 0.0
    %1643 = vmatpush1.msra.mxu0 0.0
    %1644 = vmatprep.subr.mxu0 0.0
    %1645 = vmatpush1.msra.mxu0 0.0
    %1646 = vmatprep.subr.mxu0 0.0
    %1647 = vmatpush1.msra.mxu0 0.0
    %1648 = vmatprep.subr.mxu0 0.0
    %1649 = vmatpush1.msra.mxu0 0.0
    %1650 = vmatprep.subr.mxu0 0.0
    %1651 = vmatpush1.msra.mxu0 0.0
    %1652 = vmatprep.subr.mxu0 0.0
    %1653 = vmatpush1.msra.mxu0 0.0
    %1654 = vmatprep.subr.mxu0 0.0
    %1655 = vmatpush1.msra.mxu0 0.0
    %1656 = vmatprep.subr.mxu0 0.0
    %1657 = vmatpush1.msra.mxu0 0.0
    %1658 = vmatprep.subr.mxu0 0.0
    %1659 = vmatpush1.msra.mxu0 0.0
    %1660 = vmatprep.subr.mxu0 0.0
    %1661 = vmatpush1.msra.mxu0 0.0
    %1662 = vmatprep.subr.mxu0 0.0
    %1663 = vmatpush1.msra.mxu0 0.0
    %1664 = vmatprep.subr.mxu0 0.0
    %1665 = vmatpush1.msra.mxu0 0.0
    %1666 = vmatprep.subr.mxu0 0.0
    %1667 = vmatpush1.msra.mxu0 0.0
    %1668 = vmatprep.subr.mxu0 0.0
    %1669 = vmatpush1.msra.mxu0 0.0
    %1670 = vmatprep.subr.mxu0 0.0
    %1671 = vmatpush1.msra.mxu0 0.0
    %1672 = vmatprep.subr.mxu0 0.0
    %1673 = vmatpush1.msra.mxu0 0.0
    %1674 = vmatprep.subr.mxu0 0.0
    %1675 = vmatpush1.msra.mxu0 0.0
    %1676 = vmatprep.subr.mxu0 0.0
    %1677 = vmatpush1.msra.mxu0 0.0
    %1678 = vmatprep.subr.mxu0 0.0
    %1679 = vmatpush1.msra.mxu0 0.0
    %1680 = vmatprep.subr.mxu0 0.0
    %1681 = vmatpush1.msra.mxu0 0.0
    %1682 = vmatprep.mubr.f32.mxu0 0.0
    %1683 = vmatmul.mubr.f32.gmra.mrb[0].mxu0 %v1546
    %v1684 = vpop.f32.mrb[0].mxu0
    %v1685 = vadd.f32 0.0, %v1684
    %v1686 = vpop.f32.mrb[0].mxu0
    %1687 = vdwg.mxu0
    %v1689 = vsel %vm558, %v1542, 0
    %1691 = vmatprep.subr.mxu0 0.0
    %1692 = vmatpush1.msra.mxu0 %v1539
    %1693 = vmatprep.subr.mxu0 0.0
    %1694 = vmatpush1.msra.mxu0 0.0
    %1695 = vmatprep.subr.mxu0 0.0
    %1696 = vmatpush1.msra.mxu0 0.0
    %1697 = vmatprep.subr.mxu0 0.0
    %1698 = vmatpush1.msra.mxu0 0.0
    %1699 = vmatprep.subr.mxu0 0.0
    %1700 = vmatpush1.msra.mxu0 0.0
    %1701 = vmatprep.subr.mxu0 0.0
    %1702 = vmatpush1.msra.mxu0 0.0
    %1703 = vmatprep.subr.mxu0 0.0
    %1704 = vmatpush1.msra.mxu0 0.0
    %1705 = vmatprep.subr.mxu0 0.0
    %1706 = vmatpush1.msra.mxu0 0.0
    %1707 = vmatprep.subr.mxu0 0.0
    %1708 = vmatpush1.msra.mxu0 0.0
    %1709 = vmatprep.subr.mxu0 0.0
    %1710 = vmatpush1.msra.mxu0 0.0
    %1711 = vmatprep.subr.mxu0 0.0
    %1712 = vmatpush1.msra.mxu0 0.0
    %1713 = vmatprep.subr.mxu0 0.0
    %1714 = vmatpush1.msra.mxu0 0.0
    %1715 = vmatprep.subr.mxu0 0.0
    %1716 = vmatpush1.msra.mxu0 0.0
    %1717 = vmatprep.subr.mxu0 0.0
    %1718 = vmatpush1.msra.mxu0 0.0
    %1719 = vmatprep.subr.mxu0 0.0
    %1720 = vmatpush1.msra.mxu0 0.0
    %1721 = vmatprep.subr.mxu0 0.0
    %1722 = vmatpush1.msra.mxu0 0.0
    %1723 = vmatprep.subr.mxu0 0.0
    %1724 = vmatpush1.msra.mxu0 0.0
    %1725 = vmatprep.subr.mxu0 0.0
    %1726 = vmatpush1.msra.mxu0 0.0
    %1727 = vmatprep.subr.mxu0 0.0
    %1728 = vmatpush1.msra.mxu0 0.0
    %1729 = vmatprep.subr.mxu0 0.0
    %1730 = vmatpush1.msra.mxu0 0.0
    %1731 = vmatprep.subr.mxu0 0.0
    %1732 = vmatpush1.msra.mxu0 0.0
    %1733 = vmatprep.subr.mxu0 0.0
    %1734 = vmatpush1.msra.mxu0 0.0
    %1735 = vmatprep.subr.mxu0 0.0
    %1736 = vmatpush1.msra.mxu0 0.0
    %1737 = vmatprep.subr.mxu0 0.0
    %1738 = vmatpush1.msra.mxu0 0.0
    %1739 = vmatprep.subr.mxu0 0.0
    %1740 = vmatpush1.msra.mxu0 0.0
    %1741 = vmatprep.subr.mxu0 0.0
    %1742 = vmatpush1.msra.mxu0 0.0
    %1743 = vmatprep.subr.mxu0 0.0
    %1744 = vmatpush1.msra.mxu0 0.0
    %1745 = vmatprep.subr.mxu0 0.0
    %1746 = vmatpush1.msra.mxu0 0.0
    %1747 = vmatprep.subr.mxu0 0.0
    %1748 = vmatpush1.msra.mxu0 0.0
    %1749 = vmatprep.subr.mxu0 0.0
    %1750 = vmatpush1.msra.mxu0 0.0
    %1751 = vmatprep.subr.mxu0 0.0
    %1752 = vmatpush1.msra.mxu0 0.0
    %1753 = vmatprep.subr.mxu0 0.0
    %1754 = vmatpush1.msra.mxu0 0.0
    %1755 = vmatprep.mubr.f32.mxu0 0.0
    %1756 = vmatmul.mubr.f32.gmra.mrb[0].mxu0 %v1689
    %v1757 = vpop.f32.mrb[0].mxu0
    %v1758 = vadd.f32 %v1615, %v1757
    %v1759 = vpop.f32.mrb[0].mxu0
    %1760 = vdwg.mxu0
    %1761 = vmatprep.subr.mxu0 0.0
    %1762 = vmatpush1.msra.mxu0 %v1540
    %1763 = vmatprep.subr.mxu0 0.0
    %1764 = vmatpush1.msra.mxu0 0.0
    %1765 = vmatprep.subr.mxu0 0.0
    %1766 = vmatpush1.msra.mxu0 0.0
    %1767 = vmatprep.subr.mxu0 0.0
    %1768 = vmatpush1.msra.mxu0 0.0
    %1769 = vmatprep.subr.mxu0 0.0
    %1770 = vmatpush1.msra.mxu0 0.0
    %1771 = vmatprep.subr.mxu0 0.0
    %1772 = vmatpush1.msra.mxu0 0.0
    %1773 = vmatprep.subr.mxu0 0.0
    %1774 = vmatpush1.msra.mxu0 0.0
    %1775 = vmatprep.subr.mxu0 0.0
    %1776 = vmatpush1.msra.mxu0 0.0
    %1777 = vmatprep.subr.mxu0 0.0
    %1778 = vmatpush1.msra.mxu0 0.0
    %1779 = vmatprep.subr.mxu0 0.0
    %1780 = vmatpush1.msra.mxu0 0.0
    %1781 = vmatprep.subr.mxu0 0.0
    %1782 = vmatpush1.msra.mxu0 0.0
    %1783 = vmatprep.subr.mxu0 0.0
    %1784 = vmatpush1.msra.mxu0 0.0
    %1785 = vmatprep.subr.mxu0 0.0
    %1786 = vmatpush1.msra.mxu0 0.0
    %1787 = vmatprep.subr.mxu0 0.0
    %1788 = vmatpush1.msra.mxu0 0.0
    %1789 = vmatprep.subr.mxu0 0.0
    %1790 = vmatpush1.msra.mxu0 0.0
    %1791 = vmatprep.subr.mxu0 0.0
    %1792 = vmatpush1.msra.mxu0 0.0
    %1793 = vmatprep.subr.mxu0 0.0
    %1794 = vmatpush1.msra.mxu0 0.0
    %1795 = vmatprep.subr.mxu0 0.0
    %1796 = vmatpush1.msra.mxu0 0.0
    %1797 = vmatprep.subr.mxu0 0.0
    %1798 = vmatpush1.msra.mxu0 0.0
    %1799 = vmatprep.subr.mxu0 0.0
    %1800 = vmatpush1.msra.mxu0 0.0
    %1801 = vmatprep.subr.mxu0 0.0
    %1802 = vmatpush1.msra.mxu0 0.0
    %1803 = vmatprep.subr.mxu0 0.0
    %1804 = vmatpush1.msra.mxu0 0.0
    %1805 = vmatprep.subr.mxu0 0.0
    %1806 = vmatpush1.msra.mxu0 0.0
    %1807 = vmatprep.subr.mxu0 0.0
    %1808 = vmatpush1.msra.mxu0 0.0
    %1809 = vmatprep.subr.mxu0 0.0
    %1810 = vmatpush1.msra.mxu0 0.0
    %1811 = vmatprep.subr.mxu0 0.0
    %1812 = vmatpush1.msra.mxu0 0.0
    %1813 = vmatprep.subr.mxu0 0.0
    %1814 = vmatpush1.msra.mxu0 0.0
    %1815 = vmatprep.subr.mxu0 0.0
    %1816 = vmatpush1.msra.mxu0 0.0
    %1817 = vmatprep.subr.mxu0 0.0
    %1818 = vmatpush1.msra.mxu0 0.0
    %1819 = vmatprep.subr.mxu0 0.0
    %1820 = vmatpush1.msra.mxu0 0.0
    %1821 = vmatprep.subr.mxu0 0.0
    %1822 = vmatpush1.msra.mxu0 0.0
    %1823 = vmatprep.subr.mxu0 0.0
    %1824 = vmatpush1.msra.mxu0 0.0
    %1825 = vmatprep.mubr.f32.mxu0 0.0
    %1826 = vmatmul.mubr.f32.gmra.mrb[0].mxu0 %v1689
    %v1827 = vpop.f32.mrb[0].mxu0
    %v1828 = vadd.f32 %v1685, %v1827
    %v1829 = vpop.f32.mrb[0].mxu0
    %1830 = vdwg.mxu0
    %1831 = vrot.lane.b32.xlu0 %v1529, 127
    %v1832 = vpop.permute.xlu0 %1831
    %1833 = vrot.lane.b32.xlu0 %v1530, 127
    %v1834 = vpop.permute.xlu0 %1833
    %v1837 = vsel %vm349, %v1832, 0.0
    %v1838 = vsel %vm349, %v1834, 0.0
    %s1839 = scalar_lea.vmem [#allocation2], 88
    %v1840 = vld [vmem:[%s1839] sm:$0xff]
    %v1842 = vsel %vm558, %v1840, 0
    %1844 = vmatprep.subr.mxu0 0.0
    %1845 = vmatpush1.msra.mxu0 %v1837
    %1846 = vmatprep.subr.mxu0 0.0
    %1847 = vmatpush1.msra.mxu0 0.0
    %1848 = vmatprep.subr.mxu0 0.0
    %1849 = vmatpush1.msra.mxu0 0.0
    %1850 = vmatprep.subr.mxu0 0.0
    %1851 = vmatpush1.msra.mxu0 0.0
    %1852 = vmatprep.subr.mxu0 0.0
    %1853 = vmatpush1.msra.mxu0 0.0
    %1854 = vmatprep.subr.mxu0 0.0
    %1855 = vmatpush1.msra.mxu0 0.0
    %1856 = vmatprep.subr.mxu0 0.0
    %1857 = vmatpush1.msra.mxu0 0.0
    %1858 = vmatprep.subr.mxu0 0.0
    %1859 = vmatpush1.msra.mxu0 0.0
    %1860 = vmatprep.subr.mxu0 0.0
    %1861 = vmatpush1.msra.mxu0 0.0
    %1862 = vmatprep.subr.mxu0 0.0
    %1863 = vmatpush1.msra.mxu0 0.0
    %1864 = vmatprep.subr.mxu0 0.0
    %1865 = vmatpush1.msra.mxu0 0.0
    %1866 = vmatprep.subr.mxu0 0.0
    %1867 = vmatpush1.msra.mxu0 0.0
    %1868 = vmatprep.subr.mxu0 0.0
    %1869 = vmatpush1.msra.mxu0 0.0
    %1870 = vmatprep.subr.mxu0 0.0
    %1871 = vmatpush1.msra.mxu0 0.0
    %1872 = vmatprep.subr.mxu0 0.0
    %1873 = vmatpush1.msra.mxu0 0.0
    %1874 = vmatprep.subr.mxu0 0.0
    %1875 = vmatpush1.msra.mxu0 0.0
    %1876 = vmatprep.subr.mxu0 0.0
    %1877 = vmatpush1.msra.mxu0 0.0
    %1878 = vmatprep.subr.mxu0 0.0
    %1879 = vmatpush1.msra.mxu0 0.0
    %1880 = vmatprep.subr.mxu0 0.0
    %1881 = vmatpush1.msra.mxu0 0.0
    %1882 = vmatprep.subr.mxu0 0.0
    %1883 = vmatpush1.msra.mxu0 0.0
    %1884 = vmatprep.subr.mxu0 0.0
    %1885 = vmatpush1.msra.mxu0 0.0
    %1886 = vmatprep.subr.mxu0 0.0
    %1887 = vmatpush1.msra.mxu0 0.0
    %1888 = vmatprep.subr.mxu0 0.0
    %1889 = vmatpush1.msra.mxu0 0.0
    %1890 = vmatprep.subr.mxu0 0.0
    %1891 = vmatpush1.msra.mxu0 0.0
    %1892 = vmatprep.subr.mxu0 0.0
    %1893 = vmatpush1.msra.mxu0 0.0
    %1894 = vmatprep.subr.mxu0 0.0
    %1895 = vmatpush1.msra.mxu0 0.0
    %1896 = vmatprep.subr.mxu0 0.0
    %1897 = vmatpush1.msra.mxu0 0.0
    %1898 = vmatprep.subr.mxu0 0.0
    %1899 = vmatpush1.msra.mxu0 0.0
    %1900 = vmatprep.subr.mxu0 0.0
    %1901 = vmatpush1.msra.mxu0 0.0
    %1902 = vmatprep.subr.mxu0 0.0
    %1903 = vmatpush1.msra.mxu0 0.0
    %1904 = vmatprep.subr.mxu0 0.0
    %1905 = vmatpush1.msra.mxu0 0.0
    %1906 = vmatprep.subr.mxu0 0.0
    %1907 = vmatpush1.msra.mxu0 0.0
    %1908 = vmatprep.mubr.f32.mxu0 0.0
    %1909 = vmatmul.mubr.f32.gmra.mrb[0].mxu0 %v1842
    %v1910 = vpop.f32.mrb[0].mxu0
    %v1911 = vadd.f32 0.0, %v1910
    %v1912 = vpop.f32.mrb[0].mxu0
    %1913 = vdwg.mxu0
    %1914 = vmatprep.subr.mxu0 0.0
    %1915 = vmatpush1.msra.mxu0 %v1838
    %1916 = vmatprep.subr.mxu0 0.0
    %1917 = vmatpush1.msra.mxu0 0.0
    %1918 = vmatprep.subr.mxu0 0.0
    %1919 = vmatpush1.msra.mxu0 0.0
    %1920 = vmatprep.subr.mxu0 0.0
    %1921 = vmatpush1.msra.mxu0 0.0
    %1922 = vmatprep.subr.mxu0 0.0
    %1923 = vmatpush1.msra.mxu0 0.0
    %1924 = vmatprep.subr.mxu0 0.0
    %1925 = vmatpush1.msra.mxu0 0.0
    %1926 = vmatprep.subr.mxu0 0.0
    %1927 = vmatpush1.msra.mxu0 0.0
    %1928 = vmatprep.subr.mxu0 0.0
    %1929 = vmatpush1.msra.mxu0 0.0
    %1930 = vmatprep.subr.mxu0 0.0
    %1931 = vmatpush1.msra.mxu0 0.0
    %1932 = vmatprep.subr.mxu0 0.0
    %1933 = vmatpush1.msra.mxu0 0.0
    %1934 = vmatprep.subr.mxu0 0.0
    %1935 = vmatpush1.msra.mxu0 0.0
    %1936 = vmatprep.subr.mxu0 0.0
    %1937 = vmatpush1.msra.mxu0 0.0
    %1938 = vmatprep.subr.mxu0 0.0
    %1939 = vmatpush1.msra.mxu0 0.0
    %1940 = vmatprep.subr.mxu0 0.0
    %1941 = vmatpush1.msra.mxu0 0.0
    %1942 = vmatprep.subr.mxu0 0.0
    %1943 = vmatpush1.msra.mxu0 0.0
    %1944 = vmatprep.subr.mxu0 0.0
    %1945 = vmatpush1.msra.mxu0 0.0
    %1946 = vmatprep.subr.mxu0 0.0
    %1947 = vmatpush1.msra.mxu0 0.0
    %1948 = vmatprep.subr.mxu0 0.0
    %1949 = vmatpush1.msra.mxu0 0.0
    %1950 = vmatprep.subr.mxu0 0.0
    %1951 = vmatpush1.msra.mxu0 0.0
    %1952 = vmatprep.subr.mxu0 0.0
    %1953 = vmatpush1.msra.mxu0 0.0
    %1954 = vmatprep.subr.mxu0 0.0
    %1955 = vmatpush1.msra.mxu0 0.0
    %1956 = vmatprep.subr.mxu0 0.0
    %1957 = vmatpush1.msra.mxu0 0.0
    %1958 = vmatprep.subr.mxu0 0.0
    %1959 = vmatpush1.msra.mxu0 0.0
    %1960 = vmatprep.subr.mxu0 0.0
    %1961 = vmatpush1.msra.mxu0 0.0
    %1962 = vmatprep.subr.mxu0 0.0
    %1963 = vmatpush1.msra.mxu0 0.0
    %1964 = vmatprep.subr.mxu0 0.0
    %1965 = vmatpush1.msra.mxu0 0.0
    %1966 = vmatprep.subr.mxu0 0.0
    %1967 = vmatpush1.msra.mxu0 0.0
    %1968 = vmatprep.subr.mxu0 0.0
    %1969 = vmatpush1.msra.mxu0 0.0
    %1970 = vmatprep.subr.mxu0 0.0
    %1971 = vmatpush1.msra.mxu0 0.0
    %1972 = vmatprep.subr.mxu0 0.0
    %1973 = vmatpush1.msra.mxu0 0.0
    %1974 = vmatprep.subr.mxu0 0.0
    %1975 = vmatpush1.msra.mxu0 0.0
    %1976 = vmatprep.subr.mxu0 0.0
    %1977 = vmatpush1.msra.mxu0 0.0
    %1978 = vmatprep.mubr.f32.mxu0 0.0
    %1979 = vmatmul.mubr.f32.gmra.mrb[0].mxu0 %v1842
    %v1980 = vpop.f32.mrb[0].mxu0
    %v1981 = vadd.f32 0.0, %v1980
    %v1982 = vpop.f32.mrb[0].mxu0
    %1983 = vdwg.mxu0
    %v1984 = vadd.f32 %v1758, %v1911
    %v1985 = vadd.f32 %v1828, %v1981
    %v1986 = vsel %vm505, %v1984, 0.0
    %v1987 = vsel %vm505, %v1985, 0.0
    %v1988 = vadd.f32 %v1986, %v1987
    %1989 = vadd.xlane.f32.xlu0 %v1988
    %v1990 = vpop.xlane.xlu0 %1989
    %v1991 = vmul.f32 %v1990, %v511
    %v1992 = vsub.f32 %v1984, %v1991
    %v1993 = vsub.f32 %v1985, %v1991
    %v1994 = vmul.f32 %v1992, %v1992
    %v1995 = vmul.f32 %v1993, %v1993
    %v1996 = vsel %vm505, %v1994, 0.0
    %v1997 = vsel %vm505, %v1995, 0.0
    %v1998 = vadd.f32 %v1996, %v1997
    %1999 = vadd.xlane.f32.xlu0 %v1998
    %v2000 = vpop.xlane.xlu0 %1999
    %v2001 = vmul.f32 %v2000, %v511
    %s2002 = scalar_lea.vmem %s2, 48
    %v2003 = vld [vmem:[%s2002] sm:$0xff]
    %v2004 = vld [vmem:[%s2002 + $0x8] sm:$0xff]
    %v2005 = vadd.f32 %v2001, 1e-05
    %v2006 = vrsqrt.pop %v2005
    %v2007 = vmul.f32 %v2003, %v2006
    %2009 = vset.pattern.permute.xlu0 0
    %2010 = vperm.xlu0 %2009, %v2007
    %v2011 = vpop.permute.xlu0 %2010
    %v2013 = vmul.f32 %v1992, %v2011
    %v2014 = vmul.f32 %v1993, %v2011
    %2016 = vset.pattern.permute.xlu0 0
    %2017 = vperm.xlu0 %2016, %v2004
    %v2018 = vpop.permute.xlu0 %2017
    %v2020 = vadd.f32 %v2013, %v2018
    %v2021 = vadd.f32 %v2014, %v2018
    %v2022 = vmax.f32 %v2020, 0.0
    %v2023 = vmax.f32 %v2021, 0.0
    %v2024 = vadd.f32 %v2022, %v542
    %v2025 = vadd.f32 %v2023, %v543
    %2026 = vst.msk [vmem:[#allocation5] sm:$0xff] %vm505, %v2024
    %2027 = vst.msk [vmem:[#allocation5 + $0x8] sm:$0xff] %vm505, %v2025
    // Predicated region
    $region18: #{uencoder_forward.1} parent=1 // pred_check
      _
    $region19: #{uencoder_forward.1} parent=1 // pred_check_branch
      %2029 = sbr.rel (0) target = $region21
    $region20: #{uencoder_forward.1} parent=1 // pred_region
      %s2031 = ssub.s32 256, 256
      %2032 = vsyncadd [#allocation4], %s2031
      %s2033 = sshll.u32 [#allocation5], 4
      %s2034 = int_to_ptr.vmem [resolvable:$true] %s2033
      %2039 = dma.vmem_to_hbm [thread:$0]  %s2034, 256, %s3, [#allocation4], 128, 128, 8
    $region21: #{uencoder_forward.1} parent=1 // pred_fallthru
      _
    // Predicated region
    $region22: #{uencoder_forward.1} parent=1 // pred_check
      _
    $region23: #{uencoder_forward.1} parent=1 // pred_check_branch
      %2041 = sbr.rel (0) target = $region25
    $region24: #{uencoder_forward.1} parent=1 // pred_region
      %2042 = dma.done [#allocation4], 256
    $region25: #{uencoder_forward.1} parent=1 // pred_fallthru
      _
    %2043 = vsyncpa [#allocation3], 1
    %2044 = vsyncpa [#allocation4], 1

</llo_original>
